<compile_context>
chip_gen: v6e
topology: v6e:2x2x1
jax: 0.10.0
libtpu: 0.0.40
codegen_flags: <defaults>
</compile_context>

<pallas_src>
import functools

import jax
import jax.numpy as jnp
from jax import lax
from jax.experimental import pallas as pl
from jax.experimental.pallas import tpu as pltpu

# ---------------- config (small, consistent with the module) ----------------
B = 2          # batch
L = 8          # seq_len
H = 32         # hidden_size
NH = 4         # num_attention_heads
HD = H // NH   # head_size
FF = 64        # intermediate_size
E = H + 1      # hidden + ones-column (folds q/k/v biases into the matmuls)
EPS = 1e-5     # LayerNorm eps
NEG_INF = -1e9


def _layernorm(v, gamma, beta):
    # single pass: sum and sum-of-squares are independent lane reductions
    n = v.shape[-1]
    s1 = jnp.sum(v, axis=-1, keepdims=True)
    s2 = jnp.sum(v * v, axis=-1, keepdims=True)
    mu = s1 * (1.0 / n)
    var = s2 * (1.0 / n) - mu * mu
    return (v - mu) * lax.rsqrt(var + EPS) * gamma + beta


# ----------------------------- Pallas kernel --------------------------------
def decoder_layer_kernel(
    xt_ref, mask_ref, a_ref, c_ref, wi_ref, w2_ref, vec_ref, o_ref,
    *, hidden, ff, num_heads, seq_len, batch_block,
):
    R = batch_block * seq_len

    xt = xt_ref[...]                            # (R, E) f32, last column == 1
    x = xt[:, :hidden]                          # residual (R, H) f32
    xb = xt.astype(jnp.bfloat16)                # one cast, shared by all MXU uses
    xbT = xt.T.astype(jnp.bfloat16)             # (E, R): one transpose for all heads
    xb_h = jnp.broadcast_to(xb[None], (num_heads, R, xt.shape[1]))
    xbT_h = jnp.broadcast_to(xbT[None], (num_heads, xt.shape[1], R))

    # packed small params (f32): rows = [bo, g1, be1, b2, g2, be2, bi]
    bo = vec_ref[0:1, :hidden]
    g1 = vec_ref[1:2, :hidden]
    be1 = vec_ref[2:3, :hidden]
    b2 = vec_ref[3:4, :hidden]
    g2 = vec_ref[4:5, :hidden]
    be2 = vec_ref[5:6, :hidden]
    bi = vec_ref[6:7, :ff]

    # additive attention mask (R, R), built in-kernel: per-batch (L, L) masks tiled
    # along lanes, block-diagonal across folded batches via iota batch-id compare.
    m2 = mask_ref[...].reshape(R, seq_len)                           # (R, L)
    if batch_block > 1:
        tiled = jnp.concatenate([m2] * batch_block, axis=1)          # (R, R)
        bq = lax.broadcasted_iota(
            jnp.int32, (batch_block, seq_len, R), 0).reshape(R, R)   # row batch id
        amask = jnp.where(bq == bq.T, tiled, jnp.float32(NEG_INF))
    else:
        amask = m2                                                   # (R, R)

    # ---- attention scores via head-composed weights: s_h = x~ A_h x~^T ----
    bmm = (((2,), (1,)), ((0,), (0,)))          # batched-matmul dimension_numbers
    t = lax.dot_general(xb_h, a_ref[...], bmm,
                        preferred_element_type=jnp.float32)          # (NH, R, E)
    s = lax.dot_general(t.astype(jnp.bfloat16), xbT_h, bmm,
                        preferred_element_type=jnp.float32)          # (NH, R, R)
    s = s + amask[None]

    # softmax (f32; denominator reciprocal on the EUP)
    s = s - jnp.max(s, axis=-1, keepdims=True)
    p = jnp.exp(s)
    p = p * pl.reciprocal(jnp.sum(p, axis=-1, keepdims=True), approx=True)

    # ---- value + output projection composed: attn_proj = sum_h P_h (x~ C_h) ----
    xc = lax.dot_general(xb_h, c_ref[...], bmm,
                         preferred_element_type=jnp.float32)         # (NH, R, H)
    ctx = lax.dot_general(p.astype(jnp.bfloat16), xc.astype(jnp.bfloat16), bmm,
                          preferred_element_type=jnp.float32)        # (NH, R, H)
    attn_proj = jnp.sum(ctx, axis=0)                                 # (R, H)

    # AttentionSelfOutput: Linear(attn)+bias+residual -> LayerNorm
    h1 = _layernorm(attn_proj + bo + x, g1, be1)

    # FeedForward: W2(gelu(W1(h1))) + residual(ORIGINAL x) -> LayerNorm
    inter = jnp.dot(h1.astype(jnp.bfloat16), wi_ref[...],
                    preferred_element_type=jnp.float32) + bi
    inter = jax.nn.gelu(inter, approximate=True)
    ffo = jnp.dot(inter.astype(jnp.bfloat16), w2_ref[...],
                  preferred_element_type=jnp.float32)
    out = _layernorm(ffo + b2 + x, g2, be2)

    o_ref[...] = out.astype(o_ref.dtype)


# ------------------------------- wrapper -------------------------------------
def _prepare_params(params):
    """Host-side fusion: fold scale + q/k/v biases + Wo into per-head composed weights,
    pack all small f32 params into one (8, max(H,FF)) array, cast matmul weights bf16."""
    (wq, bq, wk, bk, wv, bv, wo, bo, g1, be1, wi, bi, w2, b2, g2, be2) = params
    scale = 1.0 / (HD ** 0.5)

    def aug(w, b):                              # rows = [W ; b] -> (E, NH, HD)
        return jnp.concatenate([w, b], axis=0).reshape(E, NH, HD)

    qa, ka, va = aug(wq, bq), aug(wk, bk), aug(wv, bv)
    # A_h = (W~q_h W~k_h^T) / sqrt(d)    -> (NH, E, E)
    A = jnp.einsum('end,fnd->nef', qa, ka) * scale
    # C_h = W~v_h Wo_h                   -> (NH, E, H)
    C = jnp.einsum('end,ndf->nef', va, wo.reshape(NH, HD, H))

    width = max(H, FF)

    def row(v):
        return jnp.pad(v.astype(jnp.float32), ((0, 0), (0, width - v.shape[1])))

    vec = jnp.concatenate(
        [row(bo), row(g1), row(be1), row(b2), row(g2), row(be2), row(bi),
         jnp.zeros((1, width), jnp.float32)], axis=0)                  # (8, width)

    return (A.astype(jnp.bfloat16), C.astype(jnp.bfloat16),
            wi.astype(jnp.bfloat16), w2.astype(jnp.bfloat16), vec)


def _choose_batch_block(Bn, Ln):
    # Fold the whole batch into a single grid step (per-step overhead + duplicated
    # weight DMAs dominate at these tiny shapes on every generation, incl. v7x),
    # but cap the fold so the f32 score/prob intermediates (NH*R^2 each) stay well
    # inside even v7x's smaller VMEM if shapes are scaled up.
    budget = 8 << 20
    bb = Bn
    while bb > 1 and (Bn % bb != 0 or 3 * NH * (bb * Ln) ** 2 * 4 > budget):
        bb -= 1
    # Only split across v7x's two TensorCores when each core gets substantial work.
    try:
        kind = jax.devices()[0].device_kind.lower()
    except Exception:
        kind = ""
    if "v7" in kind and Bn % 2 == 0 and (Bn // 2) * Ln >= 256:
        bb = min(bb, Bn // 2)
    return bb


def decoder_layer(x, mask, params, *, batch_block=None):
    """x: (B, L, H) f32, mask: (B, 1, L, L) additive float mask."""
    Bn, Ln, Hn = x.shape
    bb = _choose_batch_block(Bn, Ln) if batch_block is None else batch_block
    assert Bn % bb == 0
    nb = Bn // bb
    R = bb * Ln
    En = Hn + 1
    FFn = params[10].shape[1]

    A, C, wi_b, w2_b, vec = _prepare_params(params)

    # ones-augmented, row-flattened input (folds q/k/v biases into the matmuls)
    x2 = x.reshape(Bn * Ln, Hn)
    xt = jnp.concatenate([x2, jnp.ones((Bn * Ln, 1), x.dtype)], axis=1)   # (B*L, E)
    mask3 = mask[:, 0]                                                    # (B, L, L)

    def wspec(p):
        nd = p.ndim
        return pl.BlockSpec(p.shape, lambda n, _nd=nd: (0,) * _nd)

    in_specs = [
        pl.BlockSpec((R, En), lambda n: (n, 0)),
        pl.BlockSpec((bb, Ln, Ln), lambda n: (n, 0, 0)),
        wspec(A), wspec(C), wspec(wi_b), wspec(w2_b), wspec(vec),
    ]

    flops = nb * (2 * NH * R * En * En + 2 * NH * R * R * En
                  + 2 * NH * R * En * Hn + 2 * NH * R * R * Hn
                  + 2 * R * Hn * FFn + 2 * R * FFn * Hn)
    transc = nb * (NH * R * R + R * FFn + 2 * R)
    bytes_acc = (xt.nbytes + mask3.nbytes + Bn * Ln * Hn * 4
                 + nb * (A.nbytes + C.nbytes + wi_b.nbytes + w2_b.nbytes + vec.nbytes))

    out2 = pl.pallas_call(
        functools.partial(decoder_layer_kernel, hidden=Hn, ff=FFn,
                          num_heads=NH, seq_len=Ln, batch_block=bb),
        out_shape=jax.ShapeDtypeStruct((Bn * Ln, Hn), x.dtype),
        grid=(nb,),
        in_specs=in_specs,
        out_specs=pl.BlockSpec((R, Hn), lambda n: (n, 0)),
        compiler_params=pltpu.CompilerParams(dimension_semantics=("parallel",)),
        cost_estimate=pl.CostEstimate(flops=flops, transcendentals=transc,
                                      bytes_accessed=bytes_acc),
    )(xt, mask3, A, C, wi_b, w2_b, vec)

    return out2.reshape(Bn, Ln, Hn)


# ---------------- pure-JAX (f32) reference for correctness check ----------------
def decoder_layer_ref(x, mask, params):
    (wq, bq, wk, bk, wv, bv, wo, bo, g1, be1, wi, bi, w2, b2, g2, be2) = params

    def ln(v, g, b):
        mu = jnp.mean(v, axis=-1, keepdims=True)
        var = jnp.mean((v - mu) ** 2, axis=-1, keepdims=True)
        return (v - mu) * lax.rsqrt(var + EPS) * g + b

    q = x @ wq + bq
    k = x @ wk + bk
    v = x @ wv + bv

    def split(t):  # b l (h d) -> b h l d
        return t.reshape(B, L, NH, HD).transpose(0, 2, 1, 3)

    q, k, v = split(q), split(k), split(v)
    s = jnp.einsum("bhqd,bhkd->bhqk", q, k) / (HD ** 0.5) + mask
    p = jax.nn.softmax(s, axis=-1)
    o = jnp.einsum("bhqk,bhkd->bhqd", p, v).transpose(0, 2, 1, 3).reshape(B, L, H)
    h1 = ln(o @ wo + bo + x, g1, be1)
    ff = jax.nn.gelu(h1 @ wi + bi, approximate=True) @ w2 + b2
    return ln(ff + x, g2, be2)


if __name__ == "__main__":
    key = jax.random.PRNGKey(0)
    keys = jax.random.split(key, 20)

    def lin(k, fan_in, fan_out):
        w = jax.random.normal(k, (fan_in, fan_out), jnp.float32) * (1.0 / fan_in ** 0.5)
        b = jnp.zeros((1, fan_out), jnp.float32) + 0.01
        return w, b

    wq, bq = lin(keys[0], H, H)
    wk, bk = lin(keys[1], H, H)
    wv, bv = lin(keys[2], H, H)
    wo, bo = lin(keys[3], H, H)
    g1 = jnp.ones((1, H), jnp.float32)
    be1 = jnp.zeros((1, H), jnp.float32)
    wi, bi = lin(keys[4], H, FF)
    w2, b2 = lin(keys[5], FF, H)
    g2 = jnp.ones((1, H), jnp.float32)
    be2 = jnp.zeros((1, H), jnp.float32)
    params = [wq, bq, wk, bk, wv, bv, wo, bo, g1, be1, wi, bi, w2, b2, g2, be2]

    x = jax.random.normal(keys[6], (B, L, H), jnp.float32)
    # causal additive mask (b, 1, l, l): 0 where attended, -1e9 where masked
    causal = jnp.tril(jnp.ones((L, L), jnp.bool_))
    mask = jnp.where(causal, 0.0, -1e9).astype(jnp.float32)[None, None]
    mask = jnp.broadcast_to(mask, (B, 1, L, L))

    out = decoder_layer(x, mask, params)
    out = jax.block_until_ready(out)

    ref = decoder_layer_ref(x, mask, params)
    assert out.shape == (B, L, H)
    err = float(jnp.max(jnp.abs(out - ref)))
    # Tolerance sized for bf16 MXU inputs (f32 accumulation), head-composed bf16
    # weights, and approx reciprocal in the softmax denominator.
    assert jnp.allclose(out, ref, atol=8e-2, rtol=5e-2), f"max err {err}"
    print("KERNEL_OK")
</pallas_src>

<mosaic_0001>
module attributes {stable_mosaic.version = 11 : i64} {
  func.func @decoder_layer_kernel(%arg0: i32, %arg1: memref<16x33xf32, #tpu.memory_space<vmem>>, %arg2: memref<2x8x8xf32, #tpu.memory_space<vmem>>, %arg3: memref<4x33x33xbf16, #tpu.memory_space<vmem>>, %arg4: memref<4x33x32xbf16, #tpu.memory_space<vmem>>, %arg5: memref<32x64xbf16, #tpu.memory_space<vmem>>, %arg6: memref<64x32xbf16, #tpu.memory_space<vmem>>, %arg7: memref<8x64xf32, #tpu.memory_space<vmem>>, %arg8: memref<16x32xf32, #tpu.memory_space<vmem>>) attributes {dimension_semantics = [#tpu.dimension_semantics<parallel>], iteration_bounds = array<i64: 1>, scalar_prefetch = 0 : i64, scratch_operands = 0 : i64, tpu.core_type = #tpu.core_type<tc>, window_params = [{transform_indices = @transform_0, window_bounds = array<i64: 16, 33>}, {transform_indices = @transform_1, window_bounds = array<i64: 2, 8, 8>}, {pipeline_mode = #tpu.pipeline_mode<synchronous>, transform_indices = @transform_2, window_bounds = array<i64: 4, 33, 33>}, {pipeline_mode = #tpu.pipeline_mode<synchronous>, transform_indices = @transform_3, window_bounds = array<i64: 4, 33, 32>}, {pipeline_mode = #tpu.pipeline_mode<synchronous>, transform_indices = @transform_4, window_bounds = array<i64: 32, 64>}, {pipeline_mode = #tpu.pipeline_mode<synchronous>, transform_indices = @transform_5, window_bounds = array<i64: 64, 32>}, {pipeline_mode = #tpu.pipeline_mode<synchronous>, transform_indices = @transform_6, window_bounds = array<i64: 8, 64>}, {transform_indices = @transform_7, window_bounds = array<i64: 16, 32>}]} {
    %c0 = arith.constant 0 : index
    %c0_0 = arith.constant 0 : index
    %0 = vector.load %arg1[%c0, %c0_0] : memref<16x33xf32, #tpu.memory_space<vmem>>, vector<16x33xf32>
    %1 = vector.extract_strided_slice %0 {offsets = [0, 0], sizes = [16, 32], strides = [1, 1]} : vector<16x33xf32> to vector<16x32xf32>
    %2 = arith.truncf %0 : vector<16x33xf32> to vector<16x33xbf16>
    %3 = tpu.transpose %0, [1, 0] : vector<16x33xf32> -> vector<33x16xf32>
    %4 = arith.truncf %3 : vector<33x16xf32> to vector<33x16xbf16>
    %5 = vector.shape_cast %2 : vector<16x33xbf16> to vector<1x16x33xbf16>
    %6 = vector.shape_cast %5 : vector<1x16x33xbf16> to vector<1x16x33xbf16>
    %7 = vector.broadcast %6 : vector<1x16x33xbf16> to vector<4x16x33xbf16>
    %8 = vector.shape_cast %4 : vector<33x16xbf16> to vector<1x33x16xbf16>
    %9 = vector.shape_cast %8 : vector<1x33x16xbf16> to vector<1x33x16xbf16>
    %10 = vector.broadcast %9 : vector<1x33x16xbf16> to vector<4x33x16xbf16>
    %c0_1 = arith.constant 0 : index
    %c0_2 = arith.constant 0 : index
    %11 = vector.load %arg7[%c0_1, %c0_2] : memref<8x64xf32, #tpu.memory_space<vmem>>, vector<1x32xf32>
    %c1 = arith.constant 1 : index
    %c0_3 = arith.constant 0 : index
    %12 = vector.load %arg7[%c1, %c0_3] : memref<8x64xf32, #tpu.memory_space<vmem>>, vector<1x32xf32>
    %c2 = arith.constant 2 : index
    %c0_4 = arith.constant 0 : index
    %13 = vector.load %arg7[%c2, %c0_4] : memref<8x64xf32, #tpu.memory_space<vmem>>, vector<1x32xf32>
    %c3 = arith.constant 3 : index
    %c0_5 = arith.constant 0 : index
    %14 = vector.load %arg7[%c3, %c0_5] : memref<8x64xf32, #tpu.memory_space<vmem>>, vector<1x32xf32>
    %c4 = arith.constant 4 : index
    %c0_6 = arith.constant 0 : index
    %15 = vector.load %arg7[%c4, %c0_6] : memref<8x64xf32, #tpu.memory_space<vmem>>, vector<1x32xf32>
    %c5 = arith.constant 5 : index
    %c0_7 = arith.constant 0 : index
    %16 = vector.load %arg7[%c5, %c0_7] : memref<8x64xf32, #tpu.memory_space<vmem>>, vector<1x32xf32>
    %c6 = arith.constant 6 : index
    %c0_8 = arith.constant 0 : index
    %17 = vector.load %arg7[%c6, %c0_8] : memref<8x64xf32, #tpu.memory_space<vmem>>, vector<1x64xf32>
    %c0_9 = arith.constant 0 : index
    %c0_10 = arith.constant 0 : index
    %c0_11 = arith.constant 0 : index
    %18 = vector.load %arg2[%c0_9, %c0_10, %c0_11] : memref<2x8x8xf32, #tpu.memory_space<vmem>>, vector<2x8x8xf32>
    %19 = vector.shape_cast %18 : vector<2x8x8xf32> to vector<16x8xf32>
    %20 = tpu.concatenate %19, %19 in 1 : vector<16x8xf32>, vector<16x8xf32> -> vector<16x16xf32>
    %21 = tpu.iota {dimensions = array<i32: 0>} : vector<2x8x16xi32>
    %22 = vector.shape_cast %21 : vector<2x8x16xi32> to vector<16x16xi32>
    %23 = tpu.transpose %22, [1, 0] : vector<16x16xi32> -> vector<16x16xi32>
    %24 = arith.cmpi eq, %22, %23 : vector<16x16xi32>
    %cst = arith.constant -1.000000e+09 : f32
    %25 = vector.broadcast %cst : f32 to vector<16x16xf32>
    %26 = arith.select %24, %20, %25 : vector<16x16xi1>, vector<16x16xf32>
    %c0_12 = arith.constant 0 : index
    %c0_13 = arith.constant 0 : index
    %c0_14 = arith.constant 0 : index
    %27 = vector.load %arg3[%c0_12, %c0_13, %c0_14] : memref<4x33x33xbf16, #tpu.memory_space<vmem>>, vector<4x33x33xbf16>
    %cst_15 = arith.constant dense<0.000000e+00> : vector<4x16x33xf32>
    %28 = tpu.matmul %7, %27, %cst_15 {dimension_numbers = #tpu.dot_dimension_numbers<[2], [1], [1], [2], [0, 0, 0, 1, 1, 2], [0], [0]>} : vector<4x16x33xbf16>, vector<4x33x33xbf16>, vector<4x16x33xf32> -> vector<4x16x33xf32>
    %29 = arith.truncf %28 : vector<4x16x33xf32> to vector<4x16x33xbf16>
    %cst_16 = arith.constant dense<0.000000e+00> : vector<4x16x16xf32>
    %30 = tpu.matmul %29, %10, %cst_16 {dimension_numbers = #tpu.dot_dimension_numbers<[2], [1], [1], [2], [0, 0, 0, 1, 1, 2], [0], [0]>} : vector<4x16x33xbf16>, vector<4x33x16xbf16>, vector<4x16x16xf32> -> vector<4x16x16xf32>
    %31 = vector.shape_cast %26 : vector<16x16xf32> to vector<1x16x16xf32>
    %32 = vector.broadcast %31 : vector<1x16x16xf32> to vector<4x16x16xf32>
    %33 = arith.addf %30, %32 : vector<4x16x16xf32>
    %cst_17 = arith.constant dense<0xFF800000> : vector<4x16xf32>
    %34 = vector.multi_reduction <maximumf>, %33, %cst_17 [2] : vector<4x16x16xf32> to vector<4x16xf32>
    %35 = vector.shape_cast %34 : vector<4x16xf32> to vector<4x16x1xf32>
    %36 = vector.broadcast %35 : vector<4x16x1xf32> to vector<4x16x16xf32>
    %37 = arith.subf %33, %36 : vector<4x16x16xf32>
    %38 = math.exp %37 : vector<4x16x16xf32>
    %cst_18 = arith.constant dense<0.000000e+00> : vector<4x16xf32>
    %39 = vector.multi_reduction <add>, %38, %cst_18 [2] : vector<4x16x16xf32> to vector<4x16xf32>
    %40 = vector.shape_cast %39 : vector<4x16xf32> to vector<4x16x1xf32>
    %41 = tpu.reciprocal %40 {approx = true} : vector<4x16x1xf32> -> vector<4x16x1xf32>
    %42 = vector.broadcast %41 : vector<4x16x1xf32> to vector<4x16x16xf32>
    %43 = arith.mulf %38, %42 : vector<4x16x16xf32>
    %c0_19 = arith.constant 0 : index
    %c0_20 = arith.constant 0 : index
    %c0_21 = arith.constant 0 : index
    %44 = vector.load %arg4[%c0_19, %c0_20, %c0_21] : memref<4x33x32xbf16, #tpu.memory_space<vmem>>, vector<4x33x32xbf16>
    %cst_22 = arith.constant dense<0.000000e+00> : vector<4x16x32xf32>
    %45 = tpu.matmul %7, %44, %cst_22 {dimension_numbers = #tpu.dot_dimension_numbers<[2], [1], [1], [2], [0, 0, 0, 1, 1, 2], [0], [0]>} : vector<4x16x33xbf16>, vector<4x33x32xbf16>, vector<4x16x32xf32> -> vector<4x16x32xf32>
    %46 = arith.truncf %43 : vector<4x16x16xf32> to vector<4x16x16xbf16>
    %47 = arith.truncf %45 : vector<4x16x32xf32> to vector<4x16x32xbf16>
    %cst_23 = arith.constant dense<0.000000e+00> : vector<4x16x32xf32>
    %48 = tpu.matmul %46, %47, %cst_23 {dimension_numbers = #tpu.dot_dimension_numbers<[2], [1], [1], [2], [0, 0, 0, 1, 1, 2], [0], [0]>} : vector<4x16x16xbf16>, vector<4x16x32xbf16>, vector<4x16x32xf32> -> vector<4x16x32xf32>
    %cst_24 = arith.constant dense<0.000000e+00> : vector<16x32xf32>
    %49 = vector.multi_reduction <add>, %48, %cst_24 [0] : vector<4x16x32xf32> to vector<16x32xf32>
    %50 = vector.broadcast %11 : vector<1x32xf32> to vector<16x32xf32>
    %51 = arith.addf %49, %50 : vector<16x32xf32>
    %52 = arith.addf %51, %1 : vector<16x32xf32>
    %cst_25 = arith.constant dense<0.000000e+00> : vector<16xf32>
    %53 = vector.multi_reduction <add>, %52, %cst_25 [1] : vector<16x32xf32> to vector<16xf32>
    %54 = vector.shape_cast %53 : vector<16xf32> to vector<16x1xf32>
    %55 = arith.mulf %52, %52 : vector<16x32xf32>
    %cst_26 = arith.constant dense<0.000000e+00> : vector<16xf32>
    %56 = vector.multi_reduction <add>, %55, %cst_26 [1] : vector<16x32xf32> to vector<16xf32>
    %57 = vector.shape_cast %56 : vector<16xf32> to vector<16x1xf32>
    %cst_27 = arith.constant 3.125000e-02 : f32
    %58 = vector.broadcast %cst_27 : f32 to vector<16x1xf32>
    %59 = arith.mulf %54, %58 : vector<16x1xf32>
    %cst_28 = arith.constant 3.125000e-02 : f32
    %60 = vector.broadcast %cst_28 : f32 to vector<16x1xf32>
    %61 = arith.mulf %57, %60 : vector<16x1xf32>
    %62 = arith.mulf %59, %59 : vector<16x1xf32>
    %63 = arith.subf %61, %62 : vector<16x1xf32>
    %64 = vector.broadcast %59 : vector<16x1xf32> to vector<16x32xf32>
    %65 = arith.subf %52, %64 : vector<16x32xf32>
    %cst_29 = arith.constant 9.99999974E-6 : f32
    %66 = vector.broadcast %cst_29 : f32 to vector<16x1xf32>
    %67 = arith.addf %63, %66 : vector<16x1xf32>
    %68 = math.rsqrt %67 : vector<16x1xf32>
    %69 = vector.broadcast %68 : vector<16x1xf32> to vector<16x32xf32>
    %70 = arith.mulf %65, %69 : vector<16x32xf32>
    %71 = vector.broadcast %12 : vector<1x32xf32> to vector<16x32xf32>
    %72 = arith.mulf %70, %71 : vector<16x32xf32>
    %73 = vector.broadcast %13 : vector<1x32xf32> to vector<16x32xf32>
    %74 = arith.addf %72, %73 : vector<16x32xf32>
    %75 = arith.truncf %74 : vector<16x32xf32> to vector<16x32xbf16>
    %c0_30 = arith.constant 0 : index
    %c0_31 = arith.constant 0 : index
    %76 = vector.load %arg5[%c0_30, %c0_31] : memref<32x64xbf16, #tpu.memory_space<vmem>>, vector<32x64xbf16>
    %cst_32 = arith.constant dense<0.000000e+00> : vector<16x64xf32>
    %77 = tpu.matmul %75, %76, %cst_32 {dimension_numbers = #tpu.dot_dimension_numbers<[1], [0], [0], [1], [0, 0, 1, 1], [], []>} : vector<16x32xbf16>, vector<32x64xbf16>, vector<16x64xf32> -> vector<16x64xf32>
    %78 = vector.broadcast %17 : vector<1x64xf32> to vector<16x64xf32>
    %79 = arith.addf %77, %78 : vector<16x64xf32>
    %80 = arith.mulf %79, %79 : vector<16x64xf32>
    %81 = arith.mulf %79, %80 : vector<16x64xf32>
    %cst_33 = arith.constant 4.471500e-02 : f32
    %82 = vector.broadcast %cst_33 : f32 to vector<16x64xf32>
    %83 = arith.mulf %82, %81 : vector<16x64xf32>
    %84 = arith.addf %79, %83 : vector<16x64xf32>
    %cst_34 = arith.constant 0.797884583 : f32
    %85 = vector.broadcast %cst_34 : f32 to vector<16x64xf32>
    %86 = arith.mulf %85, %84 : vector<16x64xf32>
    %87 = math.tanh %86 : vector<16x64xf32>
    %cst_35 = arith.constant 1.000000e+00 : f32
    %88 = vector.broadcast %cst_35 : f32 to vector<16x64xf32>
    %89 = arith.addf %88, %87 : vector<16x64xf32>
    %cst_36 = arith.constant 5.000000e-01 : f32
    %90 = vector.broadcast %cst_36 : f32 to vector<16x64xf32>
    %91 = arith.mulf %90, %89 : vector<16x64xf32>
    %92 = arith.mulf %79, %91 : vector<16x64xf32>
    %93 = arith.truncf %92 : vector<16x64xf32> to vector<16x64xbf16>
    %c0_37 = arith.constant 0 : index
    %c0_38 = arith.constant 0 : index
    %94 = vector.load %arg6[%c0_37, %c0_38] : memref<64x32xbf16, #tpu.memory_space<vmem>>, vector<64x32xbf16>
    %cst_39 = arith.constant dense<0.000000e+00> : vector<16x32xf32>
    %95 = tpu.matmul %93, %94, %cst_39 {dimension_numbers = #tpu.dot_dimension_numbers<[1], [0], [0], [1], [0, 0, 1, 1], [], []>} : vector<16x64xbf16>, vector<64x32xbf16>, vector<16x32xf32> -> vector<16x32xf32>
    %96 = vector.broadcast %14 : vector<1x32xf32> to vector<16x32xf32>
    %97 = arith.addf %95, %96 : vector<16x32xf32>
    %98 = arith.addf %97, %1 : vector<16x32xf32>
    %cst_40 = arith.constant dense<0.000000e+00> : vector<16xf32>
    %99 = vector.multi_reduction <add>, %98, %cst_40 [1] : vector<16x32xf32> to vector<16xf32>
    %100 = vector.shape_cast %99 : vector<16xf32> to vector<16x1xf32>
    %101 = arith.mulf %98, %98 : vector<16x32xf32>
    %cst_41 = arith.constant dense<0.000000e+00> : vector<16xf32>
    %102 = vector.multi_reduction <add>, %101, %cst_41 [1] : vector<16x32xf32> to vector<16xf32>
    %103 = vector.shape_cast %102 : vector<16xf32> to vector<16x1xf32>
    %cst_42 = arith.constant 3.125000e-02 : f32
    %104 = vector.broadcast %cst_42 : f32 to vector<16x1xf32>
    %105 = arith.mulf %100, %104 : vector<16x1xf32>
    %cst_43 = arith.constant 3.125000e-02 : f32
    %106 = vector.broadcast %cst_43 : f32 to vector<16x1xf32>
    %107 = arith.mulf %103, %106 : vector<16x1xf32>
    %108 = arith.mulf %105, %105 : vector<16x1xf32>
    %109 = arith.subf %107, %108 : vector<16x1xf32>
    %110 = vector.broadcast %105 : vector<16x1xf32> to vector<16x32xf32>
    %111 = arith.subf %98, %110 : vector<16x32xf32>
    %cst_44 = arith.constant 9.99999974E-6 : f32
    %112 = vector.broadcast %cst_44 : f32 to vector<16x1xf32>
    %113 = arith.addf %109, %112 : vector<16x1xf32>
    %114 = math.rsqrt %113 : vector<16x1xf32>
    %115 = vector.broadcast %114 : vector<16x1xf32> to vector<16x32xf32>
    %116 = arith.mulf %111, %115 : vector<16x32xf32>
    %117 = vector.broadcast %15 : vector<1x32xf32> to vector<16x32xf32>
    %118 = arith.mulf %116, %117 : vector<16x32xf32>
    %119 = vector.broadcast %16 : vector<1x32xf32> to vector<16x32xf32>
    %120 = arith.addf %118, %119 : vector<16x32xf32>
    %c0_45 = arith.constant 0 : index
    %c0_46 = arith.constant 0 : index
    %121 = vector.load %arg8[%c0_45, %c0_46] : memref<16x32xf32, #tpu.memory_space<vmem>>, vector<16x32xf32>
    tpu.vector_store %arg8[%c0_45, %c0_46], %120 {strides = array<i32>} : memref<16x32xf32, #tpu.memory_space<vmem>>, vector<16x32xf32>,
    return
  }
  func.func @transform_0(%arg0: i32) -> (i32, i32) {
    %c0_i32 = arith.constant 0 : i32
    %c0_i32_0 = arith.constant 0 : i32
    return %arg0, %c0_i32 : i32, i32
  }
  func.func @transform_1(%arg0: i32) -> (i32, i32, i32) {
    %c0_i32 = arith.constant 0 : i32
    %c0_i32_0 = arith.constant 0 : i32
    %c0_i32_1 = arith.constant 0 : i32
    return %arg0, %c0_i32, %c0_i32_0 : i32, i32, i32
  }
  func.func @transform_2(%arg0: i32) -> (i32, i32, i32) {
    %c0_i32 = arith.constant 0 : i32
    %c0_i32_0 = arith.constant 0 : i32
    %c0_i32_1 = arith.constant 0 : i32
    %c0_i32_2 = arith.constant 0 : i32
    return %c0_i32, %c0_i32_0, %c0_i32_1 : i32, i32, i32
  }
  func.func @transform_3(%arg0: i32) -> (i32, i32, i32) {
    %c0_i32 = arith.constant 0 : i32
    %c0_i32_0 = arith.constant 0 : i32
    %c0_i32_1 = arith.constant 0 : i32
    %c0_i32_2 = arith.constant 0 : i32
    return %c0_i32, %c0_i32_0, %c0_i32_1 : i32, i32, i32
  }
  func.func @transform_4(%arg0: i32) -> (i32, i32) {
    %c0_i32 = arith.constant 0 : i32
    %c0_i32_0 = arith.constant 0 : i32
    %c0_i32_1 = arith.constant 0 : i32
    return %c0_i32, %c0_i32_0 : i32, i32
  }
  func.func @transform_5(%arg0: i32) -> (i32, i32) {
    %c0_i32 = arith.constant 0 : i32
    %c0_i32_0 = arith.constant 0 : i32
    %c0_i32_1 = arith.constant 0 : i32
    return %c0_i32, %c0_i32_0 : i32, i32
  }
  func.func @transform_6(%arg0: i32) -> (i32, i32) {
    %c0_i32 = arith.constant 0 : i32
    %c0_i32_0 = arith.constant 0 : i32
    %c0_i32_1 = arith.constant 0 : i32
    return %c0_i32, %c0_i32_0 : i32, i32
  }
  func.func @transform_7(%arg0: i32) -> (i32, i32) {
    %c0_i32 = arith.constant 0 : i32
    %c0_i32_0 = arith.constant 0 : i32
    return %arg0, %c0_i32 : i32, i32
  }
}

</mosaic_0001>

<llo_original>
// kernel: tpu_custom_call.1
$region0: #{tpu_custom_call.1}
  #allocation0 [shape = 'u32[]', space=smem, size = 0x4, offset = 0x4, fixed_abs, tag = 'smem constant byte address 0x4 - core index']
  #allocation1 [shape = 'u32[144,128]{1,0:T(1,128)}', space=vmem, size = 0x12000, scoped, tag = 'internal scratch']
  %s0 = inlined_call_operand.vmem [shape: f32[16,33], index: 0, kind: input, shape index: {}]
  %s1 = inlined_call_operand.vmem [shape: f32[2,8,8], index: 1, kind: input, shape index: {}]
  %s2 = inlined_call_operand.vmem [shape: bf16[4,33,33], index: 2, kind: input, shape index: {}]
  %s3 = inlined_call_operand.vmem [shape: bf16[4,33,32], index: 3, kind: input, shape index: {}]
  %s4 = inlined_call_operand.vmem [shape: bf16[32,64], index: 4, kind: input, shape index: {}]
  %s5 = inlined_call_operand.vmem [shape: bf16[64,32], index: 5, kind: input, shape index: {}]
  %s6 = inlined_call_operand.vmem [shape: f32[8,64], index: 6, kind: input, shape index: {}]
  %s7 = inlined_call_operand.hbm [shape: f32[16,32], index: 7, kind: output, shape index: {}]
  %s8 = sld [smem:[#allocation0]]
  $region38: #{tpu_custom_call.1} parent=0
    _
  %s10 = ssub.s32 1, %s8
  %s11 = scalar_select 0, %s10, %s8
  $region1: #{tpu_custom_call.1} parent=0
    #allocation2 [shape = 'u8[8192]{0}', space=vmem, size = 0x2000, scoped, tag = 'output window, operand 0, single buffered']
    #allocation3 [shape = 's32[1]{0}', space=sflag, size = 0x4, scoped, tag = 'scoped memory for tpu_custom_call.1']
    %12 = vsyncpa [#allocation3], 0
    // Predicated region
    $region2: #{tpu_custom_call.1} parent=1 // pred_check
      _
    $region3: #{tpu_custom_call.1} parent=1 // pred_check_branch
      %14 = sbr.rel (0) target = $region5
    $region4: #{tpu_custom_call.1} parent=1 // pred_region
      _
    $region5: #{tpu_custom_call.1} parent=1 // pred_fallthru
      _
    // Predicated region
    $region6: #{tpu_custom_call.1} parent=1 // pred_check
      _
    $region7: #{tpu_custom_call.1} parent=1 // pred_check_branch
      %16 = sbr.rel (0) target = $region9
    $region8: #{tpu_custom_call.1} parent=1 // pred_region
      _
    $region9: #{tpu_custom_call.1} parent=1 // pred_fallthru
      _
    // Predicated region
    $region10: #{tpu_custom_call.1} parent=1 // pred_check
      _
    $region11: #{tpu_custom_call.1} parent=1 // pred_check_branch
      %18 = sbr.rel (0) target = $region13
    $region12: #{tpu_custom_call.1} parent=1 // pred_region
      _
    $region13: #{tpu_custom_call.1} parent=1 // pred_fallthru
      _
    // Predicated region
    $region14: #{tpu_custom_call.1} parent=1 // pred_check
      _
    $region15: #{tpu_custom_call.1} parent=1 // pred_check_branch
      %20 = sbr.rel (0) target = $region17
    $region16: #{tpu_custom_call.1} parent=1 // pred_region
      _
    $region17: #{tpu_custom_call.1} parent=1 // pred_fallthru
      _
    // Predicated region
    $region18: #{tpu_custom_call.1} parent=1 // pred_check
      _
    $region19: #{tpu_custom_call.1} parent=1 // pred_check_branch
      %22 = sbr.rel (0) target = $region21
    $region20: #{tpu_custom_call.1} parent=1 // pred_region
      _
    $region21: #{tpu_custom_call.1} parent=1 // pred_fallthru
      _
    // Predicated region
    $region22: #{tpu_custom_call.1} parent=1 // pred_check
      _
    $region23: #{tpu_custom_call.1} parent=1 // pred_check_branch
      %24 = sbr.rel (0) target = $region25
    $region24: #{tpu_custom_call.1} parent=1 // pred_region
      _
    $region25: #{tpu_custom_call.1} parent=1 // pred_fallthru
      _
    // Predicated region
    $region26: #{tpu_custom_call.1} parent=1 // pred_check
      _
    $region27: #{tpu_custom_call.1} parent=1 // pred_check_branch
      %26 = sbr.rel (0) target = $region29
    $region28: #{tpu_custom_call.1} parent=1 // pred_region
      _
    $region29: #{tpu_custom_call.1} parent=1 // pred_fallthru
      _
    %v28 = vld [vmem:[%s0] sm:$0xff]
    %v29 = vld [vmem:[%s0 + $0x8] sm:$0xff]
    %v30 = vpack.c.bf16 %v29, %v28
    %31 = vxpose.xlu0.b32.start [1/16] %v28, 128
    %32 = vxpose.xlu0.b32.cont [2/16] %v29, 128
    %33 = vxpose.xlu0.b32.cont [3/16] 0.0, 128
    %34 = vxpose.xlu0.b32.cont [4/16] 0.0, 128
    %35 = vxpose.xlu0.b32.cont [5/16] 0.0, 128
    %36 = vxpose.xlu0.b32.cont [6/16] 0.0, 128
    %37 = vxpose.xlu0.b32.cont [7/16] 0.0, 128
    %38 = vxpose.xlu0.b32.cont [8/16] 0.0, 128
    %39 = vxpose.xlu0.b32.cont [9/16] 0.0, 128
    %40 = vxpose.xlu0.b32.cont [10/16] 0.0, 128
    %41 = vxpose.xlu0.b32.cont [11/16] 0.0, 128
    %42 = vxpose.xlu0.b32.cont [12/16] 0.0, 128
    %43 = vxpose.xlu0.b32.cont [13/16] 0.0, 128
    %44 = vxpose.xlu0.b32.cont [14/16] 0.0, 128
    %45 = vxpose.xlu0.b32.cont [15/16] 0.0, 128
    %46 = vxpose.xlu0.b32.end [16/16] 0.0, 128
    %v47 = vpop.trf.xlu0
    %v48 = vpop.trf.xlu0
    %v49 = vpop.trf.xlu0
    %v50 = vpop.trf.xlu0
    %v51 = vpop.trf.xlu0
    %v52 = vpop.trf.xlu0
    %v53 = vpop.trf.xlu0
    %v54 = vpop.trf.xlu0
    %v55 = vpop.trf.xlu0
    %v56 = vpop.trf.xlu0
    %v57 = vpop.trf.xlu0
    %v58 = vpop.trf.xlu0
    %v59 = vpop.trf.xlu0
    %v60 = vpop.trf.xlu0
    %v61 = vpop.trf.xlu0
    %v62 = vpop.trf.xlu0
    %v63 = vpack.c.bf16 %v48, %v47
    %v64 = vpack.c.bf16 %v50, %v49
    %v65 = vpack.c.bf16 %v51, %v51
    %v66 = vld [vmem:[%s6] sm:$0x1]
    %v67 = vld [vmem:[%s6 + $0x1] sm:$0x1]
    %v68 = vld [vmem:[%s6 + $0x2] sm:$0x1]
    %v69 = vld [vmem:[%s6 + $0x3] sm:$0x1]
    %v70 = vld [vmem:[%s6 + $0x4] sm:$0x1]
    %v71 = vld [vmem:[%s6 + $0x5] sm:$0x1]
    %v72 = vld [vmem:[%s6 + $0x6] sm:$0x1]
    %v73 = vld [vmem:[%s1] sm:$0xff]
    %v74 = vld [vmem:[%s1 + $0x8] sm:$0xff]
    %77 = vrot.lane.b32.xlu0 %v73, 8
    %v78 = vpop.permute.xlu0 %77
    %79 = vrot.lane.b32.xlu0 %v74, 8
    %v80 = vpop.permute.xlu0 %79
    %vm83 = vcmask 64512
    %v84 = vsel %vm83, %v73, %v78
    %v85 = vsel %vm83, %v74, %v80
    %86 = vxpose.xlu0.b32.start [1/16] 0, 128
    %87 = vxpose.xlu0.b32.cont [2/16] 1, 128
    %88 = vxpose.xlu0.b32.cont [3/16] 0, 128
    %89 = vxpose.xlu0.b32.cont [4/16] 0, 128
    %90 = vxpose.xlu0.b32.cont [5/16] 0, 128
    %91 = vxpose.xlu0.b32.cont [6/16] 0, 128
    %92 = vxpose.xlu0.b32.cont [7/16] 0, 128
    %93 = vxpose.xlu0.b32.cont [8/16] 0, 128
    %94 = vxpose.xlu0.b32.cont [9/16] 0, 128
    %95 = vxpose.xlu0.b32.cont [10/16] 0, 128
    %96 = vxpose.xlu0.b32.cont [11/16] 0, 128
    %97 = vxpose.xlu0.b32.cont [12/16] 0, 128
    %98 = vxpose.xlu0.b32.cont [13/16] 0, 128
    %99 = vxpose.xlu0.b32.cont [14/16] 0, 128
    %100 = vxpose.xlu0.b32.cont [15/16] 0, 128
    %101 = vxpose.xlu0.b32.end [16/16] 0, 128
    %v102 = vpop.trf.xlu0
    %v103 = vpop.trf.xlu0
    %v104 = vpop.trf.xlu0
    %v105 = vpop.trf.xlu0
    %v106 = vpop.trf.xlu0
    %v107 = vpop.trf.xlu0
    %v108 = vpop.trf.xlu0
    %v109 = vpop.trf.xlu0
    %v110 = vpop.trf.xlu0
    %v111 = vpop.trf.xlu0
    %v112 = vpop.trf.xlu0
    %v113 = vpop.trf.xlu0
    %v114 = vpop.trf.xlu0
    %v115 = vpop.trf.xlu0
    %v116 = vpop.trf.xlu0
    %v117 = vpop.trf.xlu0
    %vm118 = vcmp.eq.s32.totalorder %v102, 0
    %vm119 = vcmp.eq.s32.totalorder %v103, 1
    %v120 = vsel %vm118, %v84, -1e+09
    %v121 = vsel %vm119, %v85, -1e+09
    %v122 = vld [vmem:[%s2] sm:$0xf]
    %v123 = vld [vmem:[%s2 + $0x4] sm:$0xf]
    %v124 = vld [vmem:[%s2 + $0x8] sm:$0xf]
    %v125 = vld [vmem:[%s2 + $0xc] sm:$0xf]
    %v126 = vld [vmem:[%s2 + $0x10] sm:$0x1]
    %v127 = vld [vmem:[%s2 + $0x14] sm:$0xf]
    %v128 = vld [vmem:[%s2 + $0x18] sm:$0xf]
    %v129 = vld [vmem:[%s2 + $0x1c] sm:$0xf]
    %v130 = vld [vmem:[%s2 + $0x20] sm:$0xf]
    %v131 = vld [vmem:[%s2 + $0x24] sm:$0x1]
    %v132 = vld [vmem:[%s2 + $0x28] sm:$0xf]
    %v133 = vld [vmem:[%s2 + $0x2c] sm:$0xf]
    %v134 = vld [vmem:[%s2 + $0x30] sm:$0xf]
    %v135 = vld [vmem:[%s2 + $0x34] sm:$0xf]
    %v136 = vld [vmem:[%s2 + $0x38] sm:$0x1]
    %v137 = vld [vmem:[%s2 + $0x3c] sm:$0xf]
    %v138 = vld [vmem:[%s2 + $0x40] sm:$0xf]
    %v139 = vld [vmem:[%s2 + $0x44] sm:$0xf]
    %v140 = vld [vmem:[%s2 + $0x48] sm:$0xf]
    %v141 = vld [vmem:[%s2 + $0x4c] sm:$0x1]
    %v147 = vunpack.c.l.b16 %v122
    %v148 = vunpack.c.l.b16 %v123
    %v149 = vunpack.c.l.b16 %v124
    %v150 = vunpack.c.l.b16 %v125
    %v151 = vunpack.c.l.b16 %v126
    %v152 = vpack.c.b16 %v148, %v147
    %v153 = vpack.c.b16 %v150, %v149
    %v154 = vpack.c.b16 %v151, %v151
    %vm157 = vcmask 269312
    %v159 = vsel %vm157, %v30, 0
    %vm161 = vcmask 1040384
    %v162 = vsel 0, 4294967295, 65535
    %v163 = vsel %vm161, %v162, 0
    %v165 = vand.u32 %v154, %v163
    %167 = vmatprep.subr.bf16.mxu0 0
    %168 = vmatpush1.bf16.msra.mxu0 0
    %169 = vmatprep.subr.bf16.mxu0 0
    %170 = vmatpush1.bf16.msra.mxu0 0
    %171 = vmatprep.subr.bf16.mxu0 0
    %172 = vmatpush1.bf16.msra.mxu0 0
    %173 = vmatprep.subr.bf16.mxu0 0
    %174 = vmatpush1.bf16.msra.mxu0 0
    %175 = vmatprep.subr.bf16.mxu0 0
    %176 = vmatpush1.bf16.msra.mxu0 0
    %177 = vmatprep.subr.bf16.mxu0 0
    %178 = vmatpush1.bf16.msra.mxu0 %v165
    %179 = vmatprep.subr.bf16.mxu0 0
    %180 = vmatpush1.bf16.msra.mxu0 %v153
    %181 = vmatprep.subr.bf16.mxu0 0
    %182 = vmatpush1.bf16.msra.mxu0 %v152
    %183 = vmatprep.subr.bf16.mxu0 0
    %184 = vmatpush2.bf16.msra.mxu0 0
    %185 = vmatprep.subr.bf16.mxu0 0
    %186 = vmatpush2.bf16.msra.mxu0 0
    %187 = vmatprep.subr.bf16.mxu0 0
    %188 = vmatpush2.bf16.msra.mxu0 0
    %189 = vmatprep.subr.bf16.mxu0 0
    %190 = vmatpush2.bf16.msra.mxu0 0
    %191 = vmatprep.subr.bf16.mxu0 0
    %192 = vmatpush2.bf16.msra.mxu0 0
    %193 = vmatprep.subr.bf16.mxu0 0
    %194 = vmatpush2.bf16.msra.mxu0 0
    %195 = vmatprep.subr.bf16.mxu0 0
    %196 = vmatpush2.bf16.msra.mxu0 0
    %197 = vmatprep.subr.bf16.mxu0 0
    %198 = vmatpush2.bf16.msra.mxu0 0
    %199 = vmatprep.mubr.bf16.mxu0 0
    %200 = vmatmul.mubr.bf16.gmra.mxu0 %v159
    %v201 = vpop.f32.mrf.mxu0
    %v202 = vadd.f32 0.0, %v201
    %v203 = vpop.f32.mrf.mxu0
    %v204 = vpop.f32.mrf.mxu0
    %v205 = vadd.f32 0.0, %v204
    %v206 = vpop.f32.mrf.mxu0
    %207 = vdwg.mxu0
    %v213 = vunpack.c.l.b16 %v127
    %v214 = vunpack.c.l.b16 %v128
    %v215 = vunpack.c.l.b16 %v129
    %v216 = vunpack.c.l.b16 %v130
    %v217 = vunpack.c.l.b16 %v131
    %v218 = vpack.c.b16 %v214, %v213
    %v219 = vpack.c.b16 %v216, %v215
    %v220 = vpack.c.b16 %v217, %v217
    %v224 = vand.u32 %v220, %v163
    %226 = vmatprep.subr.bf16.mxu0 0
    %227 = vmatpush1.bf16.msra.mxu0 0
    %228 = vmatprep.subr.bf16.mxu0 0
    %229 = vmatpush1.bf16.msra.mxu0 0
    %230 = vmatprep.subr.bf16.mxu0 0
    %231 = vmatpush1.bf16.msra.mxu0 0
    %232 = vmatprep.subr.bf16.mxu0 0
    %233 = vmatpush1.bf16.msra.mxu0 0
    %234 = vmatprep.subr.bf16.mxu0 0
    %235 = vmatpush1.bf16.msra.mxu0 0
    %236 = vmatprep.subr.bf16.mxu0 0
    %237 = vmatpush1.bf16.msra.mxu0 %v224
    %238 = vmatprep.subr.bf16.mxu0 0
    %239 = vmatpush1.bf16.msra.mxu0 %v219
    %240 = vmatprep.subr.bf16.mxu0 0
    %241 = vmatpush1.bf16.msra.mxu0 %v218
    %242 = vmatprep.subr.bf16.mxu0 0
    %243 = vmatpush2.bf16.msra.mxu0 0
    %244 = vmatprep.subr.bf16.mxu0 0
    %245 = vmatpush2.bf16.msra.mxu0 0
    %246 = vmatprep.subr.bf16.mxu0 0
    %247 = vmatpush2.bf16.msra.mxu0 0
    %248 = vmatprep.subr.bf16.mxu0 0
    %249 = vmatpush2.bf16.msra.mxu0 0
    %250 = vmatprep.subr.bf16.mxu0 0
    %251 = vmatpush2.bf16.msra.mxu0 0
    %252 = vmatprep.subr.bf16.mxu0 0
    %253 = vmatpush2.bf16.msra.mxu0 0
    %254 = vmatprep.subr.bf16.mxu0 0
    %255 = vmatpush2.bf16.msra.mxu0 0
    %256 = vmatprep.subr.bf16.mxu0 0
    %257 = vmatpush2.bf16.msra.mxu0 0
    %258 = vmatprep.mubr.bf16.mxu0 0
    %259 = vmatmul.mubr.bf16.gmra.mxu0 %v159
    %v260 = vpop.f32.mrf.mxu0
    %v261 = vadd.f32 0.0, %v260
    %v262 = vpop.f32.mrf.mxu0
    %v263 = vpop.f32.mrf.mxu0
    %v264 = vadd.f32 0.0, %v263
    %v265 = vpop.f32.mrf.mxu0
    %266 = vdwg.mxu0
    %v272 = vunpack.c.l.b16 %v132
    %v273 = vunpack.c.l.b16 %v133
    %v274 = vunpack.c.l.b16 %v134
    %v275 = vunpack.c.l.b16 %v135
    %v276 = vunpack.c.l.b16 %v136
    %v277 = vpack.c.b16 %v273, %v272
    %v278 = vpack.c.b16 %v275, %v274
    %v279 = vpack.c.b16 %v276, %v276
    %v283 = vand.u32 %v279, %v163
    %285 = vmatprep.subr.bf16.mxu0 0
    %286 = vmatpush1.bf16.msra.mxu0 0
    %287 = vmatprep.subr.bf16.mxu0 0
    %288 = vmatpush1.bf16.msra.mxu0 0
    %289 = vmatprep.subr.bf16.mxu0 0
    %290 = vmatpush1.bf16.msra.mxu0 0
    %291 = vmatprep.subr.bf16.mxu0 0
    %292 = vmatpush1.bf16.msra.mxu0 0
    %293 = vmatprep.subr.bf16.mxu0 0
    %294 = vmatpush1.bf16.msra.mxu0 0
    %295 = vmatprep.subr.bf16.mxu0 0
    %296 = vmatpush1.bf16.msra.mxu0 %v283
    %297 = vmatprep.subr.bf16.mxu0 0
    %298 = vmatpush1.bf16.msra.mxu0 %v278
    %299 = vmatprep.subr.bf16.mxu0 0
    %300 = vmatpush1.bf16.msra.mxu0 %v277
    %301 = vmatprep.subr.bf16.mxu0 0
    %302 = vmatpush2.bf16.msra.mxu0 0
    %303 = vmatprep.subr.bf16.mxu0 0
    %304 = vmatpush2.bf16.msra.mxu0 0
    %305 = vmatprep.subr.bf16.mxu0 0
    %306 = vmatpush2.bf16.msra.mxu0 0
    %307 = vmatprep.subr.bf16.mxu0 0
    %308 = vmatpush2.bf16.msra.mxu0 0
    %309 = vmatprep.subr.bf16.mxu0 0
    %310 = vmatpush2.bf16.msra.mxu0 0
    %311 = vmatprep.subr.bf16.mxu0 0
    %312 = vmatpush2.bf16.msra.mxu0 0
    %313 = vmatprep.subr.bf16.mxu0 0
    %314 = vmatpush2.bf16.msra.mxu0 0
    %315 = vmatprep.subr.bf16.mxu0 0
    %316 = vmatpush2.bf16.msra.mxu0 0
    %317 = vmatprep.mubr.bf16.mxu0 0
    %318 = vmatmul.mubr.bf16.gmra.mxu0 %v159
    %v319 = vpop.f32.mrf.mxu0
    %v320 = vadd.f32 0.0, %v319
    %v321 = vpop.f32.mrf.mxu0
    %v322 = vpop.f32.mrf.mxu0
    %v323 = vadd.f32 0.0, %v322
    %v324 = vpop.f32.mrf.mxu0
    %325 = vdwg.mxu0
    %v331 = vunpack.c.l.b16 %v137
    %v332 = vunpack.c.l.b16 %v138
    %v333 = vunpack.c.l.b16 %v139
    %v334 = vunpack.c.l.b16 %v140
    %v335 = vunpack.c.l.b16 %v141
    %v336 = vpack.c.b16 %v332, %v331
    %v337 = vpack.c.b16 %v334, %v333
    %v338 = vpack.c.b16 %v335, %v335
    %v342 = vand.u32 %v338, %v163
    %344 = vmatprep.subr.bf16.mxu0 0
    %345 = vmatpush1.bf16.msra.mxu0 0
    %346 = vmatprep.subr.bf16.mxu0 0
    %347 = vmatpush1.bf16.msra.mxu0 0
    %348 = vmatprep.subr.bf16.mxu0 0
    %349 = vmatpush1.bf16.msra.mxu0 0
    %350 = vmatprep.subr.bf16.mxu0 0
    %351 = vmatpush1.bf16.msra.mxu0 0
    %352 = vmatprep.subr.bf16.mxu0 0
    %353 = vmatpush1.bf16.msra.mxu0 0
    %354 = vmatprep.subr.bf16.mxu0 0
    %355 = vmatpush1.bf16.msra.mxu0 %v342
    %356 = vmatprep.subr.bf16.mxu0 0
    %357 = vmatpush1.bf16.msra.mxu0 %v337
    %358 = vmatprep.subr.bf16.mxu0 0
    %359 = vmatpush1.bf16.msra.mxu0 %v336
    %360 = vmatprep.subr.bf16.mxu0 0
    %361 = vmatpush2.bf16.msra.mxu0 0
    %362 = vmatprep.subr.bf16.mxu0 0
    %363 = vmatpush2.bf16.msra.mxu0 0
    %364 = vmatprep.subr.bf16.mxu0 0
    %365 = vmatpush2.bf16.msra.mxu0 0
    %366 = vmatprep.subr.bf16.mxu0 0
    %367 = vmatpush2.bf16.msra.mxu0 0
    %368 = vmatprep.subr.bf16.mxu0 0
    %369 = vmatpush2.bf16.msra.mxu0 0
    %370 = vmatprep.subr.bf16.mxu0 0
    %371 = vmatpush2.bf16.msra.mxu0 0
    %372 = vmatprep.subr.bf16.mxu0 0
    %373 = vmatpush2.bf16.msra.mxu0 0
    %374 = vmatprep.subr.bf16.mxu0 0
    %375 = vmatpush2.bf16.msra.mxu0 0
    %376 = vmatprep.mubr.bf16.mxu0 0
    %377 = vmatmul.mubr.bf16.gmra.mxu0 %v159
    %v378 = vpop.f32.mrf.mxu0
    %v379 = vadd.f32 0.0, %v378
    %v380 = vpop.f32.mrf.mxu0
    %v381 = vpop.f32.mrf.mxu0
    %v382 = vadd.f32 0.0, %v381
    %v383 = vpop.f32.mrf.mxu0
    %384 = vdwg.mxu0
    %v385 = vpack.c.bf16 %v205, %v202
    %v386 = vpack.c.bf16 %v264, %v261
    %v387 = vpack.c.bf16 %v323, %v320
    %v388 = vpack.c.bf16 %v382, %v379
    %v390 = vsel %vm157, %v385, 0
    %v393 = vand.u32 %v65, %v163
    %395 = vmatprep.subr.bf16.mxu0 0
    %396 = vmatpush1.bf16.msra.mxu0 0
    %397 = vmatprep.subr.bf16.mxu0 0
    %398 = vmatpush1.bf16.msra.mxu0 0
    %399 = vmatprep.subr.bf16.mxu0 0
    %400 = vmatpush1.bf16.msra.mxu0 0
    %401 = vmatprep.subr.bf16.mxu0 0
    %402 = vmatpush1.bf16.msra.mxu0 0
    %403 = vmatprep.subr.bf16.mxu0 0
    %404 = vmatpush1.bf16.msra.mxu0 0
    %405 = vmatprep.subr.bf16.mxu0 0
    %406 = vmatpush1.bf16.msra.mxu0 %v393
    %407 = vmatprep.subr.bf16.mxu0 0
    %408 = vmatpush1.bf16.msra.mxu0 %v64
    %409 = vmatprep.subr.bf16.mxu0 0
    %410 = vmatpush1.bf16.msra.mxu0 %v63
    %411 = vmatprep.subr.bf16.mxu0 0
    %412 = vmatpush2.bf16.msra.mxu0 0
    %413 = vmatprep.subr.bf16.mxu0 0
    %414 = vmatpush2.bf16.msra.mxu0 0
    %415 = vmatprep.subr.bf16.mxu0 0
    %416 = vmatpush2.bf16.msra.mxu0 0
    %417 = vmatprep.subr.bf16.mxu0 0
    %418 = vmatpush2.bf16.msra.mxu0 0
    %419 = vmatprep.subr.bf16.mxu0 0
    %420 = vmatpush2.bf16.msra.mxu0 0
    %421 = vmatprep.subr.bf16.mxu0 0
    %422 = vmatpush2.bf16.msra.mxu0 0
    %423 = vmatprep.subr.bf16.mxu0 0
    %424 = vmatpush2.bf16.msra.mxu0 0
    %425 = vmatprep.subr.bf16.mxu0 0
    %426 = vmatpush2.bf16.msra.mxu0 0
    %427 = vmatprep.mubr.bf16.mxu0 0
    %428 = vmatmul.mubr.bf16.gmra.mxu0 %v390
    %v429 = vpop.f32.mrf.mxu0
    %v430 = vadd.f32 %v120, %v429
    %v431 = vpop.f32.mrf.mxu0
    %v432 = vpop.f32.mrf.mxu0
    %v433 = vadd.f32 %v121, %v432
    %v434 = vpop.f32.mrf.mxu0
    %435 = vdwg.mxu0
    %v437 = vsel %vm157, %v386, 0
    %439 = vmatprep.subr.bf16.mxu0 0
    %440 = vmatpush1.bf16.msra.mxu0 0
    %441 = vmatprep.subr.bf16.mxu0 0
    %442 = vmatpush1.bf16.msra.mxu0 0
    %443 = vmatprep.subr.bf16.mxu0 0
    %444 = vmatpush1.bf16.msra.mxu0 0
    %445 = vmatprep.subr.bf16.mxu0 0
    %446 = vmatpush1.bf16.msra.mxu0 0
    %447 = vmatprep.subr.bf16.mxu0 0
    %448 = vmatpush1.bf16.msra.mxu0 0
    %449 = vmatprep.subr.bf16.mxu0 0
    %450 = vmatpush1.bf16.msra.mxu0 %v393
    %451 = vmatprep.subr.bf16.mxu0 0
    %452 = vmatpush1.bf16.msra.mxu0 %v64
    %453 = vmatprep.subr.bf16.mxu0 0
    %454 = vmatpush1.bf16.msra.mxu0 %v63
    %455 = vmatprep.subr.bf16.mxu0 0
    %456 = vmatpush2.bf16.msra.mxu0 0
    %457 = vmatprep.subr.bf16.mxu0 0
    %458 = vmatpush2.bf16.msra.mxu0 0
    %459 = vmatprep.subr.bf16.mxu0 0
    %460 = vmatpush2.bf16.msra.mxu0 0
    %461 = vmatprep.subr.bf16.mxu0 0
    %462 = vmatpush2.bf16.msra.mxu0 0
    %463 = vmatprep.subr.bf16.mxu0 0
    %464 = vmatpush2.bf16.msra.mxu0 0
    %465 = vmatprep.subr.bf16.mxu0 0
    %466 = vmatpush2.bf16.msra.mxu0 0
    %467 = vmatprep.subr.bf16.mxu0 0
    %468 = vmatpush2.bf16.msra.mxu0 0
    %469 = vmatprep.subr.bf16.mxu0 0
    %470 = vmatpush2.bf16.msra.mxu0 0
    %471 = vmatprep.mubr.bf16.mxu0 0
    %472 = vmatmul.mubr.bf16.gmra.mxu0 %v437
    %v473 = vpop.f32.mrf.mxu0
    %v474 = vadd.f32 %v120, %v473
    %v475 = vpop.f32.mrf.mxu0
    %v476 = vpop.f32.mrf.mxu0
    %v477 = vadd.f32 %v121, %v476
    %v478 = vpop.f32.mrf.mxu0
    %479 = vdwg.mxu0
    %v481 = vsel %vm157, %v387, 0
    %483 = vmatprep.subr.bf16.mxu0 0
    %484 = vmatpush1.bf16.msra.mxu0 0
    %485 = vmatprep.subr.bf16.mxu0 0
    %486 = vmatpush1.bf16.msra.mxu0 0
    %487 = vmatprep.subr.bf16.mxu0 0
    %488 = vmatpush1.bf16.msra.mxu0 0
    %489 = vmatprep.subr.bf16.mxu0 0
    %490 = vmatpush1.bf16.msra.mxu0 0
    %491 = vmatprep.subr.bf16.mxu0 0
    %492 = vmatpush1.bf16.msra.mxu0 0
    %493 = vmatprep.subr.bf16.mxu0 0
    %494 = vmatpush1.bf16.msra.mxu0 %v393
    %495 = vmatprep.subr.bf16.mxu0 0
    %496 = vmatpush1.bf16.msra.mxu0 %v64
    %497 = vmatprep.subr.bf16.mxu0 0
    %498 = vmatpush1.bf16.msra.mxu0 %v63
    %499 = vmatprep.subr.bf16.mxu0 0
    %500 = vmatpush2.bf16.msra.mxu0 0
    %501 = vmatprep.subr.bf16.mxu0 0
    %502 = vmatpush2.bf16.msra.mxu0 0
    %503 = vmatprep.subr.bf16.mxu0 0
    %504 = vmatpush2.bf16.msra.mxu0 0
    %505 = vmatprep.subr.bf16.mxu0 0
    %506 = vmatpush2.bf16.msra.mxu0 0
    %507 = vmatprep.subr.bf16.mxu0 0
    %508 = vmatpush2.bf16.msra.mxu0 0
    %509 = vmatprep.subr.bf16.mxu0 0
    %510 = vmatpush2.bf16.msra.mxu0 0
    %511 = vmatprep.subr.bf16.mxu0 0
    %512 = vmatpush2.bf16.msra.mxu0 0
    %513 = vmatprep.subr.bf16.mxu0 0
    %514 = vmatpush2.bf16.msra.mxu0 0
    %515 = vmatprep.mubr.bf16.mxu0 0
    %516 = vmatmul.mubr.bf16.gmra.mxu0 %v481
    %v517 = vpop.f32.mrf.mxu0
    %v518 = vadd.f32 %v120, %v517
    %v519 = vpop.f32.mrf.mxu0
    %v520 = vpop.f32.mrf.mxu0
    %v521 = vadd.f32 %v121, %v520
    %v522 = vpop.f32.mrf.mxu0
    %523 = vdwg.mxu0
    %v525 = vsel %vm157, %v388, 0
    %527 = vmatprep.subr.bf16.mxu0 0
    %528 = vmatpush1.bf16.msra.mxu0 0
    %529 = vmatprep.subr.bf16.mxu0 0
    %530 = vmatpush1.bf16.msra.mxu0 0
    %531 = vmatprep.subr.bf16.mxu0 0
    %532 = vmatpush1.bf16.msra.mxu0 0
    %533 = vmatprep.subr.bf16.mxu0 0
    %534 = vmatpush1.bf16.msra.mxu0 0
    %535 = vmatprep.subr.bf16.mxu0 0
    %536 = vmatpush1.bf16.msra.mxu0 0
    %537 = vmatprep.subr.bf16.mxu0 0
    %538 = vmatpush1.bf16.msra.mxu0 %v393
    %539 = vmatprep.subr.bf16.mxu0 0
    %540 = vmatpush1.bf16.msra.mxu0 %v64
    %541 = vmatprep.subr.bf16.mxu0 0
    %542 = vmatpush1.bf16.msra.mxu0 %v63
    %543 = vmatprep.subr.bf16.mxu0 0
    %544 = vmatpush2.bf16.msra.mxu0 0
    %545 = vmatprep.subr.bf16.mxu0 0
    %546 = vmatpush2.bf16.msra.mxu0 0
    %547 = vmatprep.subr.bf16.mxu0 0
    %548 = vmatpush2.bf16.msra.mxu0 0
    %549 = vmatprep.subr.bf16.mxu0 0
    %550 = vmatpush2.bf16.msra.mxu0 0
    %551 = vmatprep.subr.bf16.mxu0 0
    %552 = vmatpush2.bf16.msra.mxu0 0
    %553 = vmatprep.subr.bf16.mxu0 0
    %554 = vmatpush2.bf16.msra.mxu0 0
    %555 = vmatprep.subr.bf16.mxu0 0
    %556 = vmatpush2.bf16.msra.mxu0 0
    %557 = vmatprep.subr.bf16.mxu0 0
    %558 = vmatpush2.bf16.msra.mxu0 0
    %559 = vmatprep.mubr.bf16.mxu0 0
    %560 = vmatmul.mubr.bf16.gmra.mxu0 %v525
    %v561 = vpop.f32.mrf.mxu0
    %v562 = vadd.f32 %v120, %v561
    %v563 = vpop.f32.mrf.mxu0
    %v564 = vpop.f32.mrf.mxu0
    %v565 = vadd.f32 %v121, %v564
    %v566 = vpop.f32.mrf.mxu0
    %567 = vdwg.mxu0
    %vm568 = vcmask 130048
    %v569 = vsel %vm568, %v430, -inf
    %570 = vmax.xlane.f32.xlu0 %v569
    %v571 = vpop.xlane.xlu0 %570
    %v572 = vsel %vm568, %v433, -inf
    %573 = vmax.xlane.f32.xlu0 %v572
    %v574 = vpop.xlane.xlu0 %573
    %v575 = vsel %vm568, %v474, -inf
    %576 = vmax.xlane.f32.xlu0 %v575
    %v577 = vpop.xlane.xlu0 %576
    %v578 = vsel %vm568, %v477, -inf
    %579 = vmax.xlane.f32.xlu0 %v578
    %v580 = vpop.xlane.xlu0 %579
    %v581 = vsel %vm568, %v518, -inf
    %582 = vmax.xlane.f32.xlu0 %v581
    %v583 = vpop.xlane.xlu0 %582
    %v584 = vsel %vm568, %v521, -inf
    %585 = vmax.xlane.f32.xlu0 %v584
    %v586 = vpop.xlane.xlu0 %585
    %v587 = vsel %vm568, %v562, -inf
    %588 = vmax.xlane.f32.xlu0 %v587
    %v589 = vpop.xlane.xlu0 %588
    %v590 = vsel %vm568, %v565, -inf
    %591 = vmax.xlane.f32.xlu0 %v590
    %v592 = vpop.xlane.xlu0 %591
    %v593 = vsub.f32 %v430, %v571
    %v594 = vsub.f32 %v433, %v574
    %v595 = vsub.f32 %v474, %v577
    %v596 = vsub.f32 %v477, %v580
    %v597 = vsub.f32 %v518, %v583
    %v598 = vsub.f32 %v521, %v586
    %v599 = vsub.f32 %v562, %v589
    %v600 = vsub.f32 %v565, %v592
    %v601 = vmul.f32 %v593, 1.442695
    %v602 = vpow.pop %v601
    %v603 = vmul.f32 %v594, 1.442695
    %v604 = vpow.pop %v603
    %v605 = vmul.f32 %v595, 1.442695
    %v606 = vpow.pop %v605
    %v607 = vmul.f32 %v596, 1.442695
    %v608 = vpow.pop %v607
    %v609 = vmul.f32 %v597, 1.442695
    %v610 = vpow.pop %v609
    %v611 = vmul.f32 %v598, 1.442695
    %v612 = vpow.pop %v611
    %v613 = vmul.f32 %v599, 1.442695
    %v614 = vpow.pop %v613
    %v615 = vmul.f32 %v600, 1.442695
    %v616 = vpow.pop %v615
    %v617 = vsel %vm568, %v602, 0.0
    %618 = vadd.xlane.f32.xlu0 %v617
    %v619 = vpop.xlane.xlu0 %618
    %v620 = vsel %vm568, %v604, 0.0
    %621 = vadd.xlane.f32.xlu0 %v620
    %v622 = vpop.xlane.xlu0 %621
    %v623 = vsel %vm568, %v606, 0.0
    %624 = vadd.xlane.f32.xlu0 %v623
    %v625 = vpop.xlane.xlu0 %624
    %v626 = vsel %vm568, %v608, 0.0
    %627 = vadd.xlane.f32.xlu0 %v626
    %v628 = vpop.xlane.xlu0 %627
    %v629 = vsel %vm568, %v610, 0.0
    %630 = vadd.xlane.f32.xlu0 %v629
    %v631 = vpop.xlane.xlu0 %630
    %v632 = vsel %vm568, %v612, 0.0
    %633 = vadd.xlane.f32.xlu0 %v632
    %v634 = vpop.xlane.xlu0 %633
    %v635 = vsel %vm568, %v614, 0.0
    %636 = vadd.xlane.f32.xlu0 %v635
    %v637 = vpop.xlane.xlu0 %636
    %v638 = vsel %vm568, %v616, 0.0
    %639 = vadd.xlane.f32.xlu0 %v638
    %v640 = vpop.xlane.xlu0 %639
    %v641 = vrcp.pop %v619
    %v642 = vrcp.pop %v622
    %v643 = vrcp.pop %v625
    %v644 = vrcp.pop %v628
    %v645 = vrcp.pop %v631
    %v646 = vrcp.pop %v634
    %v647 = vrcp.pop %v637
    %v648 = vrcp.pop %v640
    %v649 = vmul.f32 %v602, %v641
    %v650 = vmul.f32 %v604, %v642
    %v651 = vmul.f32 %v606, %v643
    %v652 = vmul.f32 %v608, %v644
    %v653 = vmul.f32 %v610, %v645
    %v654 = vmul.f32 %v612, %v646
    %v655 = vmul.f32 %v614, %v647
    %v656 = vmul.f32 %v616, %v648
    %v657 = vld [vmem:[%s3] sm:$0xf]
    %v658 = vld [vmem:[%s3 + $0x4] sm:$0xf]
    %v659 = vld [vmem:[%s3 + $0x8] sm:$0xf]
    %v660 = vld [vmem:[%s3 + $0xc] sm:$0xf]
    %v661 = vld [vmem:[%s3 + $0x10] sm:$0x1]
    %v662 = vld [vmem:[%s3 + $0x14] sm:$0xf]
    %v663 = vld [vmem:[%s3 + $0x18] sm:$0xf]
    %v664 = vld [vmem:[%s3 + $0x1c] sm:$0xf]
    %v665 = vld [vmem:[%s3 + $0x20] sm:$0xf]
    %v666 = vld [vmem:[%s3 + $0x24] sm:$0x1]
    %v667 = vld [vmem:[%s3 + $0x28] sm:$0xf]
    %v668 = vld [vmem:[%s3 + $0x2c] sm:$0xf]
    %v669 = vld [vmem:[%s3 + $0x30] sm:$0xf]
    %v670 = vld [vmem:[%s3 + $0x34] sm:$0xf]
    %v671 = vld [vmem:[%s3 + $0x38] sm:$0x1]
    %v672 = vld [vmem:[%s3 + $0x3c] sm:$0xf]
    %v673 = vld [vmem:[%s3 + $0x40] sm:$0xf]
    %v674 = vld [vmem:[%s3 + $0x44] sm:$0xf]
    %v675 = vld [vmem:[%s3 + $0x48] sm:$0xf]
    %v676 = vld [vmem:[%s3 + $0x4c] sm:$0x1]
    %v682 = vunpack.c.l.b16 %v657
    %v683 = vunpack.c.l.b16 %v658
    %v684 = vunpack.c.l.b16 %v659
    %v685 = vunpack.c.l.b16 %v660
    %v686 = vunpack.c.l.b16 %v661
    %v687 = vpack.c.b16 %v683, %v682
    %v688 = vpack.c.b16 %v685, %v684
    %v689 = vpack.c.b16 %v686, %v686
    %v693 = vand.u32 %v689, %v163
    %695 = vmatprep.subr.bf16.mxu0 0
    %696 = vmatpush1.bf16.msra.mxu0 0
    %697 = vmatprep.subr.bf16.mxu0 0
    %698 = vmatpush1.bf16.msra.mxu0 0
    %699 = vmatprep.subr.bf16.mxu0 0
    %700 = vmatpush1.bf16.msra.mxu0 0
    %701 = vmatprep.subr.bf16.mxu0 0
    %702 = vmatpush1.bf16.msra.mxu0 0
    %703 = vmatprep.subr.bf16.mxu0 0
    %704 = vmatpush1.bf16.msra.mxu0 0
    %705 = vmatprep.subr.bf16.mxu0 0
    %706 = vmatpush1.bf16.msra.mxu0 %v693
    %707 = vmatprep.subr.bf16.mxu0 0
    %708 = vmatpush1.bf16.msra.mxu0 %v688
    %709 = vmatprep.subr.bf16.mxu0 0
    %710 = vmatpush1.bf16.msra.mxu0 %v687
    %711 = vmatprep.subr.bf16.mxu0 0
    %712 = vmatpush2.bf16.msra.mxu0 0
    %713 = vmatprep.subr.bf16.mxu0 0
    %714 = vmatpush2.bf16.msra.mxu0 0
    %715 = vmatprep.subr.bf16.mxu0 0
    %716 = vmatpush2.bf16.msra.mxu0 0
    %717 = vmatprep.subr.bf16.mxu0 0
    %718 = vmatpush2.bf16.msra.mxu0 0
    %719 = vmatprep.subr.bf16.mxu0 0
    %720 = vmatpush2.bf16.msra.mxu0 0
    %721 = vmatprep.subr.bf16.mxu0 0
    %722 = vmatpush2.bf16.msra.mxu0 0
    %723 = vmatprep.subr.bf16.mxu0 0
    %724 = vmatpush2.bf16.msra.mxu0 0
    %725 = vmatprep.subr.bf16.mxu0 0
    %726 = vmatpush2.bf16.msra.mxu0 0
    %727 = vmatprep.mubr.bf16.mxu0 0
    %728 = vmatmul.mubr.bf16.gmra.mxu0 %v159
    %v729 = vpop.f32.mrf.mxu0
    %v730 = vadd.f32 0.0, %v729
    %v731 = vpop.f32.mrf.mxu0
    %v732 = vpop.f32.mrf.mxu0
    %v733 = vadd.f32 0.0, %v732
    %v734 = vpop.f32.mrf.mxu0
    %735 = vdwg.mxu0
    %v741 = vunpack.c.l.b16 %v662
    %v742 = vunpack.c.l.b16 %v663
    %v743 = vunpack.c.l.b16 %v664
    %v744 = vunpack.c.l.b16 %v665
    %v745 = vunpack.c.l.b16 %v666
    %v746 = vpack.c.b16 %v742, %v741
    %v747 = vpack.c.b16 %v744, %v743
    %v748 = vpack.c.b16 %v745, %v745
    %v752 = vand.u32 %v748, %v163
    %754 = vmatprep.subr.bf16.mxu0 0
    %755 = vmatpush1.bf16.msra.mxu0 0
    %756 = vmatprep.subr.bf16.mxu0 0
    %757 = vmatpush1.bf16.msra.mxu0 0
    %758 = vmatprep.subr.bf16.mxu0 0
    %759 = vmatpush1.bf16.msra.mxu0 0
    %760 = vmatprep.subr.bf16.mxu0 0
    %761 = vmatpush1.bf16.msra.mxu0 0
    %762 = vmatprep.subr.bf16.mxu0 0
    %763 = vmatpush1.bf16.msra.mxu0 0
    %764 = vmatprep.subr.bf16.mxu0 0
    %765 = vmatpush1.bf16.msra.mxu0 %v752
    %766 = vmatprep.subr.bf16.mxu0 0
    %767 = vmatpush1.bf16.msra.mxu0 %v747
    %768 = vmatprep.subr.bf16.mxu0 0
    %769 = vmatpush1.bf16.msra.mxu0 %v746
    %770 = vmatprep.subr.bf16.mxu0 0
    %771 = vmatpush2.bf16.msra.mxu0 0
    %772 = vmatprep.subr.bf16.mxu0 0
    %773 = vmatpush2.bf16.msra.mxu0 0
    %774 = vmatprep.subr.bf16.mxu0 0
    %775 = vmatpush2.bf16.msra.mxu0 0
    %776 = vmatprep.subr.bf16.mxu0 0
    %777 = vmatpush2.bf16.msra.mxu0 0
    %778 = vmatprep.subr.bf16.mxu0 0
    %779 = vmatpush2.bf16.msra.mxu0 0
    %780 = vmatprep.subr.bf16.mxu0 0
    %781 = vmatpush2.bf16.msra.mxu0 0
    %782 = vmatprep.subr.bf16.mxu0 0
    %783 = vmatpush2.bf16.msra.mxu0 0
    %784 = vmatprep.subr.bf16.mxu0 0
    %785 = vmatpush2.bf16.msra.mxu0 0
    %786 = vmatprep.mubr.bf16.mxu0 0
    %787 = vmatmul.mubr.bf16.gmra.mxu0 %v159
    %v788 = vpop.f32.mrf.mxu0
    %v789 = vadd.f32 0.0, %v788
    %v790 = vpop.f32.mrf.mxu0
    %v791 = vpop.f32.mrf.mxu0
    %v792 = vadd.f32 0.0, %v791
    %v793 = vpop.f32.mrf.mxu0
    %794 = vdwg.mxu0
    %v800 = vunpack.c.l.b16 %v667
    %v801 = vunpack.c.l.b16 %v668
    %v802 = vunpack.c.l.b16 %v669
    %v803 = vunpack.c.l.b16 %v670
    %v804 = vunpack.c.l.b16 %v671
    %v805 = vpack.c.b16 %v801, %v800
    %v806 = vpack.c.b16 %v803, %v802
    %v807 = vpack.c.b16 %v804, %v804
    %v811 = vand.u32 %v807, %v163
    %813 = vmatprep.subr.bf16.mxu0 0
    %814 = vmatpush1.bf16.msra.mxu0 0
    %815 = vmatprep.subr.bf16.mxu0 0
    %816 = vmatpush1.bf16.msra.mxu0 0
    %817 = vmatprep.subr.bf16.mxu0 0
    %818 = vmatpush1.bf16.msra.mxu0 0
    %819 = vmatprep.subr.bf16.mxu0 0
    %820 = vmatpush1.bf16.msra.mxu0 0
    %821 = vmatprep.subr.bf16.mxu0 0
    %822 = vmatpush1.bf16.msra.mxu0 0
    %823 = vmatprep.subr.bf16.mxu0 0
    %824 = vmatpush1.bf16.msra.mxu0 %v811
    %825 = vmatprep.subr.bf16.mxu0 0
    %826 = vmatpush1.bf16.msra.mxu0 %v806
    %827 = vmatprep.subr.bf16.mxu0 0
    %828 = vmatpush1.bf16.msra.mxu0 %v805
    %829 = vmatprep.subr.bf16.mxu0 0
    %830 = vmatpush2.bf16.msra.mxu0 0
    %831 = vmatprep.subr.bf16.mxu0 0
    %832 = vmatpush2.bf16.msra.mxu0 0
    %833 = vmatprep.subr.bf16.mxu0 0
    %834 = vmatpush2.bf16.msra.mxu0 0
    %835 = vmatprep.subr.bf16.mxu0 0
    %836 = vmatpush2.bf16.msra.mxu0 0
    %837 = vmatprep.subr.bf16.mxu0 0
    %838 = vmatpush2.bf16.msra.mxu0 0
    %839 = vmatprep.subr.bf16.mxu0 0
    %840 = vmatpush2.bf16.msra.mxu0 0
    %841 = vmatprep.subr.bf16.mxu0 0
    %842 = vmatpush2.bf16.msra.mxu0 0
    %843 = vmatprep.subr.bf16.mxu0 0
    %844 = vmatpush2.bf16.msra.mxu0 0
    %845 = vmatprep.mubr.bf16.mxu0 0
    %846 = vmatmul.mubr.bf16.gmra.mxu0 %v159
    %v847 = vpop.f32.mrf.mxu0
    %v848 = vadd.f32 0.0, %v847
    %v849 = vpop.f32.mrf.mxu0
    %v850 = vpop.f32.mrf.mxu0
    %v851 = vadd.f32 0.0, %v850
    %v852 = vpop.f32.mrf.mxu0
    %853 = vdwg.mxu0
    %v859 = vunpack.c.l.b16 %v672
    %v860 = vunpack.c.l.b16 %v673
    %v861 = vunpack.c.l.b16 %v674
    %v862 = vunpack.c.l.b16 %v675
    %v863 = vunpack.c.l.b16 %v676
    %v864 = vpack.c.b16 %v860, %v859
    %v865 = vpack.c.b16 %v862, %v861
    %v866 = vpack.c.b16 %v863, %v863
    %v870 = vand.u32 %v866, %v163
    %872 = vmatprep.subr.bf16.mxu0 0
    %873 = vmatpush1.bf16.msra.mxu0 0
    %874 = vmatprep.subr.bf16.mxu0 0
    %875 = vmatpush1.bf16.msra.mxu0 0
    %876 = vmatprep.subr.bf16.mxu0 0
    %877 = vmatpush1.bf16.msra.mxu0 0
    %878 = vmatprep.subr.bf16.mxu0 0
    %879 = vmatpush1.bf16.msra.mxu0 0
    %880 = vmatprep.subr.bf16.mxu0 0
    %881 = vmatpush1.bf16.msra.mxu0 0
    %882 = vmatprep.subr.bf16.mxu0 0
    %883 = vmatpush1.bf16.msra.mxu0 %v870
    %884 = vmatprep.subr.bf16.mxu0 0
    %885 = vmatpush1.bf16.msra.mxu0 %v865
    %886 = vmatprep.subr.bf16.mxu0 0
    %887 = vmatpush1.bf16.msra.mxu0 %v864
    %888 = vmatprep.subr.bf16.mxu0 0
    %889 = vmatpush2.bf16.msra.mxu0 0
    %890 = vmatprep.subr.bf16.mxu0 0
    %891 = vmatpush2.bf16.msra.mxu0 0
    %892 = vmatprep.subr.bf16.mxu0 0
    %893 = vmatpush2.bf16.msra.mxu0 0
    %894 = vmatprep.subr.bf16.mxu0 0
    %895 = vmatpush2.bf16.msra.mxu0 0
    %896 = vmatprep.subr.bf16.mxu0 0
    %897 = vmatpush2.bf16.msra.mxu0 0
    %898 = vmatprep.subr.bf16.mxu0 0
    %899 = vmatpush2.bf16.msra.mxu0 0
    %900 = vmatprep.subr.bf16.mxu0 0
    %901 = vmatpush2.bf16.msra.mxu0 0
    %902 = vmatprep.subr.bf16.mxu0 0
    %903 = vmatpush2.bf16.msra.mxu0 0
    %904 = vmatprep.mubr.bf16.mxu0 0
    %905 = vmatmul.mubr.bf16.gmra.mxu0 %v159
    %v906 = vpop.f32.mrf.mxu0
    %v907 = vadd.f32 0.0, %v906
    %v908 = vpop.f32.mrf.mxu0
    %v909 = vpop.f32.mrf.mxu0
    %v910 = vadd.f32 0.0, %v909
    %v911 = vpop.f32.mrf.mxu0
    %912 = vdwg.mxu0
    %v913 = vpack.c.bf16 %v650, %v649
    %v914 = vpack.c.bf16 %v652, %v651
    %v915 = vpack.c.bf16 %v654, %v653
    %v916 = vpack.c.bf16 %v656, %v655
    %v917 = vpack.c.bf16 %v733, %v730
    %v918 = vpack.c.bf16 %v792, %v789
    %v919 = vpack.c.bf16 %v851, %v848
    %v920 = vpack.c.bf16 %v910, %v907
    %v922 = vsel %vm568, %v913, 0
    %924 = vmatprep.subr.bf16.mxu0 0
    %925 = vmatpush1.bf16.msra.mxu0 0
    %926 = vmatprep.subr.bf16.mxu0 0
    %927 = vmatpush1.bf16.msra.mxu0 0
    %928 = vmatprep.subr.bf16.mxu0 0
    %929 = vmatpush1.bf16.msra.mxu0 0
    %930 = vmatprep.subr.bf16.mxu0 0
    %931 = vmatpush1.bf16.msra.mxu0 0
    %932 = vmatprep.subr.bf16.mxu0 0
    %933 = vmatpush1.bf16.msra.mxu0 0
    %934 = vmatprep.subr.bf16.mxu0 0
    %935 = vmatpush1.bf16.msra.mxu0 0
    %936 = vmatprep.subr.bf16.mxu0 0
    %937 = vmatpush1.bf16.msra.mxu0 0
    %938 = vmatprep.subr.bf16.mxu0 0
    %939 = vmatpush1.bf16.msra.mxu0 %v917
    %940 = vmatprep.subr.bf16.mxu0 0
    %941 = vmatpush2.bf16.msra.mxu0 0
    %942 = vmatprep.subr.bf16.mxu0 0
    %943 = vmatpush2.bf16.msra.mxu0 0
    %944 = vmatprep.subr.bf16.mxu0 0
    %945 = vmatpush2.bf16.msra.mxu0 0
    %946 = vmatprep.subr.bf16.mxu0 0
    %947 = vmatpush2.bf16.msra.mxu0 0
    %948 = vmatprep.subr.bf16.mxu0 0
    %949 = vmatpush2.bf16.msra.mxu0 0
    %950 = vmatprep.subr.bf16.mxu0 0
    %951 = vmatpush2.bf16.msra.mxu0 0
    %952 = vmatprep.subr.bf16.mxu0 0
    %953 = vmatpush2.bf16.msra.mxu0 0
    %954 = vmatprep.subr.bf16.mxu0 0
    %955 = vmatpush2.bf16.msra.mxu0 0
    %956 = vmatprep.mubr.bf16.mxu0 0
    %957 = vmatmul.mubr.bf16.gmra.mxu0 %v922
    %v958 = vpop.f32.mrf.mxu0
    %v959 = vadd.f32 0.0, %v958
    %v960 = vpop.f32.mrf.mxu0
    %v961 = vpop.f32.mrf.mxu0
    %v962 = vadd.f32 0.0, %v961
    %v963 = vpop.f32.mrf.mxu0
    %964 = vdwg.mxu0
    %v966 = vsel %vm568, %v914, 0
    %968 = vmatprep.subr.bf16.mxu0 0
    %969 = vmatpush1.bf16.msra.mxu0 0
    %970 = vmatprep.subr.bf16.mxu0 0
    %971 = vmatpush1.bf16.msra.mxu0 0
    %972 = vmatprep.subr.bf16.mxu0 0
    %973 = vmatpush1.bf16.msra.mxu0 0
    %974 = vmatprep.subr.bf16.mxu0 0
    %975 = vmatpush1.bf16.msra.mxu0 0
    %976 = vmatprep.subr.bf16.mxu0 0
    %977 = vmatpush1.bf16.msra.mxu0 0
    %978 = vmatprep.subr.bf16.mxu0 0
    %979 = vmatpush1.bf16.msra.mxu0 0
    %980 = vmatprep.subr.bf16.mxu0 0
    %981 = vmatpush1.bf16.msra.mxu0 0
    %982 = vmatprep.subr.bf16.mxu0 0
    %983 = vmatpush1.bf16.msra.mxu0 %v918
    %984 = vmatprep.subr.bf16.mxu0 0
    %985 = vmatpush2.bf16.msra.mxu0 0
    %986 = vmatprep.subr.bf16.mxu0 0
    %987 = vmatpush2.bf16.msra.mxu0 0
    %988 = vmatprep.subr.bf16.mxu0 0
    %989 = vmatpush2.bf16.msra.mxu0 0
    %990 = vmatprep.subr.bf16.mxu0 0
    %991 = vmatpush2.bf16.msra.mxu0 0
    %992 = vmatprep.subr.bf16.mxu0 0
    %993 = vmatpush2.bf16.msra.mxu0 0
    %994 = vmatprep.subr.bf16.mxu0 0
    %995 = vmatpush2.bf16.msra.mxu0 0
    %996 = vmatprep.subr.bf16.mxu0 0
    %997 = vmatpush2.bf16.msra.mxu0 0
    %998 = vmatprep.subr.bf16.mxu0 0
    %999 = vmatpush2.bf16.msra.mxu0 0
    %1000 = vmatprep.mubr.bf16.mxu0 0
    %1001 = vmatmul.mubr.bf16.gmra.mxu0 %v966
    %v1002 = vpop.f32.mrf.mxu0
    %v1003 = vadd.f32 0.0, %v1002
    %v1004 = vpop.f32.mrf.mxu0
    %v1005 = vpop.f32.mrf.mxu0
    %v1006 = vadd.f32 0.0, %v1005
    %v1007 = vpop.f32.mrf.mxu0
    %1008 = vdwg.mxu0
    %v1010 = vsel %vm568, %v915, 0
    %1012 = vmatprep.subr.bf16.mxu0 0
    %1013 = vmatpush1.bf16.msra.mxu0 0
    %1014 = vmatprep.subr.bf16.mxu0 0
    %1015 = vmatpush1.bf16.msra.mxu0 0
    %1016 = vmatprep.subr.bf16.mxu0 0
    %1017 = vmatpush1.bf16.msra.mxu0 0
    %1018 = vmatprep.subr.bf16.mxu0 0
    %1019 = vmatpush1.bf16.msra.mxu0 0
    %1020 = vmatprep.subr.bf16.mxu0 0
    %1021 = vmatpush1.bf16.msra.mxu0 0
    %1022 = vmatprep.subr.bf16.mxu0 0
    %1023 = vmatpush1.bf16.msra.mxu0 0
    %1024 = vmatprep.subr.bf16.mxu0 0
    %1025 = vmatpush1.bf16.msra.mxu0 0
    %1026 = vmatprep.subr.bf16.mxu0 0
    %1027 = vmatpush1.bf16.msra.mxu0 %v919
    %1028 = vmatprep.subr.bf16.mxu0 0
    %1029 = vmatpush2.bf16.msra.mxu0 0
    %1030 = vmatprep.subr.bf16.mxu0 0
    %1031 = vmatpush2.bf16.msra.mxu0 0
    %1032 = vmatprep.subr.bf16.mxu0 0
    %1033 = vmatpush2.bf16.msra.mxu0 0
    %1034 = vmatprep.subr.bf16.mxu0 0
    %1035 = vmatpush2.bf16.msra.mxu0 0
    %1036 = vmatprep.subr.bf16.mxu0 0
    %1037 = vmatpush2.bf16.msra.mxu0 0
    %1038 = vmatprep.subr.bf16.mxu0 0
    %1039 = vmatpush2.bf16.msra.mxu0 0
    %1040 = vmatprep.subr.bf16.mxu0 0
    %1041 = vmatpush2.bf16.msra.mxu0 0
    %1042 = vmatprep.subr.bf16.mxu0 0
    %1043 = vmatpush2.bf16.msra.mxu0 0
    %1044 = vmatprep.mubr.bf16.mxu0 0
    %1045 = vmatmul.mubr.bf16.gmra.mxu0 %v1010
    %v1046 = vpop.f32.mrf.mxu0
    %v1047 = vadd.f32 0.0, %v1046
    %v1048 = vpop.f32.mrf.mxu0
    %v1049 = vpop.f32.mrf.mxu0
    %v1050 = vadd.f32 0.0, %v1049
    %v1051 = vpop.f32.mrf.mxu0
    %1052 = vdwg.mxu0
    %v1054 = vsel %vm568, %v916, 0
    %1056 = vmatprep.subr.bf16.mxu0 0
    %1057 = vmatpush1.bf16.msra.mxu0 0
    %1058 = vmatprep.subr.bf16.mxu0 0
    %1059 = vmatpush1.bf16.msra.mxu0 0
    %1060 = vmatprep.subr.bf16.mxu0 0
    %1061 = vmatpush1.bf16.msra.mxu0 0
    %1062 = vmatprep.subr.bf16.mxu0 0
    %1063 = vmatpush1.bf16.msra.mxu0 0
    %1064 = vmatprep.subr.bf16.mxu0 0
    %1065 = vmatpush1.bf16.msra.mxu0 0
    %1066 = vmatprep.subr.bf16.mxu0 0
    %1067 = vmatpush1.bf16.msra.mxu0 0
    %1068 = vmatprep.subr.bf16.mxu0 0
    %1069 = vmatpush1.bf16.msra.mxu0 0
    %1070 = vmatprep.subr.bf16.mxu0 0
    %1071 = vmatpush1.bf16.msra.mxu0 %v920
    %1072 = vmatprep.subr.bf16.mxu0 0
    %1073 = vmatpush2.bf16.msra.mxu0 0
    %1074 = vmatprep.subr.bf16.mxu0 0
    %1075 = vmatpush2.bf16.msra.mxu0 0
    %1076 = vmatprep.subr.bf16.mxu0 0
    %1077 = vmatpush2.bf16.msra.mxu0 0
    %1078 = vmatprep.subr.bf16.mxu0 0
    %1079 = vmatpush2.bf16.msra.mxu0 0
    %1080 = vmatprep.subr.bf16.mxu0 0
    %1081 = vmatpush2.bf16.msra.mxu0 0
    %1082 = vmatprep.subr.bf16.mxu0 0
    %1083 = vmatpush2.bf16.msra.mxu0 0
    %1084 = vmatprep.subr.bf16.mxu0 0
    %1085 = vmatpush2.bf16.msra.mxu0 0
    %1086 = vmatprep.subr.bf16.mxu0 0
    %1087 = vmatpush2.bf16.msra.mxu0 0
    %1088 = vmatprep.mubr.bf16.mxu0 0
    %1089 = vmatmul.mubr.bf16.gmra.mxu0 %v1054
    %v1090 = vpop.f32.mrf.mxu0
    %v1091 = vadd.f32 0.0, %v1090
    %v1092 = vpop.f32.mrf.mxu0
    %v1093 = vpop.f32.mrf.mxu0
    %v1094 = vadd.f32 0.0, %v1093
    %v1095 = vpop.f32.mrf.mxu0
    %1096 = vdwg.mxu0
    %vm1097 = vcmask 261120
    %v1098 = vsel %vm1097, %v959, 0.0
    %v1099 = vsel %vm1097, %v1003, 0.0
    %v1100 = vadd.f32 %v1098, %v1099
    %v1101 = vsel %vm1097, %v1047, 0.0
    %v1102 = vadd.f32 %v1100, %v1101
    %v1103 = vsel %vm1097, %v1091, 0.0
    %v1104 = vadd.f32 %v1102, %v1103
    %v1105 = vsel %vm1097, %v962, 0.0
    %v1106 = vsel %vm1097, %v1006, 0.0
    %v1107 = vadd.f32 %v1105, %v1106
    %v1108 = vsel %vm1097, %v1050, 0.0
    %v1109 = vadd.f32 %v1107, %v1108
    %v1110 = vsel %vm1097, %v1094, 0.0
    %v1111 = vadd.f32 %v1109, %v1110
    %v1112 = vlaneseq
    %v1113 = vshrl.u32 %v1112, 7
    %v1114 = vsub.s32 0, %v1113
    %v1115 = vrot.slane %v66, %v1114
    %v1116 = vadd.f32 %v1104, %v1115
    %v1117 = vadd.f32 %v1111, %v1115
    %v1118 = vadd.f32 %v1116, %v28
    %v1119 = vadd.f32 %v1117, %v29
    %v1120 = vsel %vm1097, %v1118, 0.0
    %1121 = vadd.xlane.f32.xlu0 %v1120
    %v1122 = vpop.xlane.xlu0 %1121
    %v1123 = vsel %vm1097, %v1119, 0.0
    %1124 = vadd.xlane.f32.xlu0 %v1123
    %v1125 = vpop.xlane.xlu0 %1124
    %v1126 = vmul.f32 %v1118, %v1118
    %v1127 = vmul.f32 %v1119, %v1119
    %v1128 = vsel %vm1097, %v1126, 0.0
    %1129 = vadd.xlane.f32.xlu0 %v1128
    %v1130 = vpop.xlane.xlu0 %1129
    %v1131 = vsel %vm1097, %v1127, 0.0
    %1132 = vadd.xlane.f32.xlu0 %v1131
    %v1133 = vpop.xlane.xlu0 %1132
    %v1134 = vmul.f32 %v1122, 0.03125
    %v1135 = vmul.f32 %v1125, 0.03125
    %v1136 = vmul.f32 %v1130, 0.03125
    %v1137 = vmul.f32 %v1133, 0.03125
    %v1138 = vmul.f32 %v1134, %v1134
    %v1139 = vmul.f32 %v1135, %v1135
    %v1140 = vsub.f32 %v1136, %v1138
    %v1141 = vsub.f32 %v1137, %v1139
    %v1142 = vsub.f32 %v1118, %v1134
    %v1143 = vsub.f32 %v1119, %v1135
    %v1144 = vadd.f32 %v1140, 1e-05
    %v1145 = vadd.f32 %v1141, 1e-05
    %v1146 = vrsqrt.pop %v1144
    %v1147 = vrsqrt.pop %v1145
    %v1148 = vmul.f32 %v1142, %v1146
    %v1149 = vmul.f32 %v1143, %v1147
    %v1150 = vlaneseq
    %v1151 = vshrl.u32 %v1150, 7
    %v1152 = vsub.s32 0, %v1151
    %v1153 = vrot.slane %v67, %v1152
    %v1154 = vmul.f32 %v1148, %v1153
    %v1155 = vmul.f32 %v1149, %v1153
    %v1156 = vlaneseq
    %v1157 = vshrl.u32 %v1156, 7
    %v1158 = vsub.s32 0, %v1157
    %v1159 = vrot.slane %v68, %v1158
    %v1160 = vadd.f32 %v1154, %v1159
    %v1161 = vadd.f32 %v1155, %v1159
    %v1162 = vpack.c.bf16 %v1161, %v1160
    %v1163 = vld [vmem:[%s4] sm:$0xf]
    %v1164 = vld [vmem:[%s4 + $0x4] sm:$0xf]
    %v1165 = vld [vmem:[%s4 + $0x8] sm:$0xf]
    %v1166 = vld [vmem:[%s4 + $0xc] sm:$0xf]
    %v1167 = vlaneseq
    %v1168 = vshrl.u32 %v1167, 7
    %v1169 = vsub.s32 0, %v1168
    %v1170 = vrot.slane %v72, %v1169
    %v1175 = vunpack.c.l.b16 %v1163
    %v1176 = vunpack.c.l.b16 %v1164
    %v1177 = vunpack.c.l.b16 %v1165
    %v1178 = vunpack.c.l.b16 %v1166
    %v1179 = vpack.c.b16 %v1176, %v1175
    %v1180 = vpack.c.b16 %v1178, %v1177
    %v1184 = vsel %vm1097, %v1162, 0
    %1186 = vmatprep.subr.bf16.mxu0 0
    %1187 = vmatpush1.bf16.msra.mxu0 0
    %1188 = vmatprep.subr.bf16.mxu0 0
    %1189 = vmatpush1.bf16.msra.mxu0 0
    %1190 = vmatprep.subr.bf16.mxu0 0
    %1191 = vmatpush1.bf16.msra.mxu0 0
    %1192 = vmatprep.subr.bf16.mxu0 0
    %1193 = vmatpush1.bf16.msra.mxu0 0
    %1194 = vmatprep.subr.bf16.mxu0 0
    %1195 = vmatpush1.bf16.msra.mxu0 0
    %1196 = vmatprep.subr.bf16.mxu0 0
    %1197 = vmatpush1.bf16.msra.mxu0 0
    %1198 = vmatprep.subr.bf16.mxu0 0
    %1199 = vmatpush1.bf16.msra.mxu0 %v1180
    %1200 = vmatprep.subr.bf16.mxu0 0
    %1201 = vmatpush1.bf16.msra.mxu0 %v1179
    %1202 = vmatprep.subr.bf16.mxu0 0
    %1203 = vmatpush2.bf16.msra.mxu0 0
    %1204 = vmatprep.subr.bf16.mxu0 0
    %1205 = vmatpush2.bf16.msra.mxu0 0
    %1206 = vmatprep.subr.bf16.mxu0 0
    %1207 = vmatpush2.bf16.msra.mxu0 0
    %1208 = vmatprep.subr.bf16.mxu0 0
    %1209 = vmatpush2.bf16.msra.mxu0 0
    %1210 = vmatprep.subr.bf16.mxu0 0
    %1211 = vmatpush2.bf16.msra.mxu0 0
    %1212 = vmatprep.subr.bf16.mxu0 0
    %1213 = vmatpush2.bf16.msra.mxu0 0
    %1214 = vmatprep.subr.bf16.mxu0 0
    %1215 = vmatpush2.bf16.msra.mxu0 0
    %1216 = vmatprep.subr.bf16.mxu0 0
    %1217 = vmatpush2.bf16.msra.mxu0 0
    %1218 = vmatprep.mubr.bf16.mxu0 0
    %1219 = vmatmul.mubr.bf16.gmra.mxu0 %v1184
    %v1220 = vpop.f32.mrf.mxu0
    %v1221 = vadd.f32 %v1170, %v1220
    %v1222 = vpop.f32.mrf.mxu0
    %v1223 = vpop.f32.mrf.mxu0
    %v1224 = vadd.f32 %v1170, %v1223
    %v1225 = vpop.f32.mrf.mxu0
    %1226 = vdwg.mxu0
    %v1227 = vmul.f32 %v1221, %v1221
    %v1228 = vmul.f32 %v1224, %v1224
    %v1229 = vmul.f32 %v1221, %v1227
    %v1230 = vmul.f32 %v1224, %v1228
    %v1231 = vmul.f32 %v1229, 0.044715
    %v1232 = vmul.f32 %v1230, 0.044715
    %v1233 = vadd.f32 %v1221, %v1231
    %v1234 = vadd.f32 %v1224, %v1232
    %v1235 = vmul.f32 %v1233, 0.7978846
    %v1236 = vmul.f32 %v1234, 0.7978846
    %v1237 = vtanh.pop %v1235
    %v1238 = vtanh.pop %v1236
    %v1239 = vadd.f32 %v1237, 1.0
    %v1240 = vadd.f32 %v1238, 1.0
    %v1241 = vmul.f32 %v1239, 0.5
    %v1242 = vmul.f32 %v1240, 0.5
    %v1243 = vmul.f32 %v1221, %v1241
    %v1244 = vmul.f32 %v1224, %v1242
    %v1245 = vpack.c.bf16 %v1244, %v1243
    %v1246 = vld [vmem:[%s5] sm:$0xf]
    %v1247 = vld [vmem:[%s5 + $0x4] sm:$0xf]
    %v1248 = vld [vmem:[%s5 + $0x8] sm:$0xf]
    %v1249 = vld [vmem:[%s5 + $0xc] sm:$0xf]
    %v1250 = vld [vmem:[%s5 + $0x10] sm:$0xf]
    %v1251 = vld [vmem:[%s5 + $0x14] sm:$0xf]
    %v1252 = vld [vmem:[%s5 + $0x18] sm:$0xf]
    %v1253 = vld [vmem:[%s5 + $0x1c] sm:$0xf]
    %v1254 = vlaneseq
    %v1255 = vshrl.u32 %v1254, 7
    %v1256 = vsub.s32 0, %v1255
    %v1257 = vrot.slane %v69, %v1256
    %v1266 = vunpack.c.l.b16 %v1246
    %v1267 = vunpack.c.l.b16 %v1247
    %v1268 = vunpack.c.l.b16 %v1248
    %v1269 = vunpack.c.l.b16 %v1249
    %v1270 = vunpack.c.l.b16 %v1250
    %v1271 = vunpack.c.l.b16 %v1251
    %v1272 = vunpack.c.l.b16 %v1252
    %v1273 = vunpack.c.l.b16 %v1253
    %v1274 = vpack.c.b16 %v1267, %v1266
    %v1275 = vpack.c.b16 %v1269, %v1268
    %v1276 = vpack.c.b16 %v1271, %v1270
    %v1277 = vpack.c.b16 %v1273, %v1272
    %vm1282 = vcmask 523264
    %v1284 = vsel %vm1282, %v1245, 0
    %1286 = vmatprep.subr.bf16.mxu0 0
    %1287 = vmatpush1.bf16.msra.mxu0 0
    %1288 = vmatprep.subr.bf16.mxu0 0
    %1289 = vmatpush1.bf16.msra.mxu0 0
    %1290 = vmatprep.subr.bf16.mxu0 0
    %1291 = vmatpush1.bf16.msra.mxu0 0
    %1292 = vmatprep.subr.bf16.mxu0 0
    %1293 = vmatpush1.bf16.msra.mxu0 0
    %1294 = vmatprep.subr.bf16.mxu0 0
    %1295 = vmatpush1.bf16.msra.mxu0 %v1277
    %1296 = vmatprep.subr.bf16.mxu0 0
    %1297 = vmatpush1.bf16.msra.mxu0 %v1276
    %1298 = vmatprep.subr.bf16.mxu0 0
    %1299 = vmatpush1.bf16.msra.mxu0 %v1275
    %1300 = vmatprep.subr.bf16.mxu0 0
    %1301 = vmatpush1.bf16.msra.mxu0 %v1274
    %1302 = vmatprep.subr.bf16.mxu0 0
    %1303 = vmatpush2.bf16.msra.mxu0 0
    %1304 = vmatprep.subr.bf16.mxu0 0
    %1305 = vmatpush2.bf16.msra.mxu0 0
    %1306 = vmatprep.subr.bf16.mxu0 0
    %1307 = vmatpush2.bf16.msra.mxu0 0
    %1308 = vmatprep.subr.bf16.mxu0 0
    %1309 = vmatpush2.bf16.msra.mxu0 0
    %1310 = vmatprep.subr.bf16.mxu0 0
    %1311 = vmatpush2.bf16.msra.mxu0 0
    %1312 = vmatprep.subr.bf16.mxu0 0
    %1313 = vmatpush2.bf16.msra.mxu0 0
    %1314 = vmatprep.subr.bf16.mxu0 0
    %1315 = vmatpush2.bf16.msra.mxu0 0
    %1316 = vmatprep.subr.bf16.mxu0 0
    %1317 = vmatpush2.bf16.msra.mxu0 0
    %1318 = vmatprep.mubr.bf16.mxu0 0
    %1319 = vmatmul.mubr.bf16.gmra.mxu0 %v1284
    %v1320 = vpop.f32.mrf.mxu0
    %v1321 = vadd.f32 %v1257, %v1320
    %v1322 = vpop.f32.mrf.mxu0
    %v1323 = vpop.f32.mrf.mxu0
    %v1324 = vadd.f32 %v1257, %v1323
    %v1325 = vpop.f32.mrf.mxu0
    %1326 = vdwg.mxu0
    %v1327 = vadd.f32 %v1321, %v28
    %v1328 = vadd.f32 %v1324, %v29
    %v1329 = vsel %vm1097, %v1327, 0.0
    %1330 = vadd.xlane.f32.xlu0 %v1329
    %v1331 = vpop.xlane.xlu0 %1330
    %v1332 = vsel %vm1097, %v1328, 0.0
    %1333 = vadd.xlane.f32.xlu0 %v1332
    %v1334 = vpop.xlane.xlu0 %1333
    %v1335 = vmul.f32 %v1327, %v1327
    %v1336 = vmul.f32 %v1328, %v1328
    %v1337 = vsel %vm1097, %v1335, 0.0
    %1338 = vadd.xlane.f32.xlu0 %v1337
    %v1339 = vpop.xlane.xlu0 %1338
    %v1340 = vsel %vm1097, %v1336, 0.0
    %1341 = vadd.xlane.f32.xlu0 %v1340
    %v1342 = vpop.xlane.xlu0 %1341
    %v1343 = vmul.f32 %v1331, 0.03125
    %v1344 = vmul.f32 %v1334, 0.03125
    %v1345 = vmul.f32 %v1339, 0.03125
    %v1346 = vmul.f32 %v1342, 0.03125
    %v1347 = vmul.f32 %v1343, %v1343
    %v1348 = vmul.f32 %v1344, %v1344
    %v1349 = vsub.f32 %v1345, %v1347
    %v1350 = vsub.f32 %v1346, %v1348
    %v1351 = vsub.f32 %v1327, %v1343
    %v1352 = vsub.f32 %v1328, %v1344
    %v1353 = vadd.f32 %v1349, 1e-05
    %v1354 = vadd.f32 %v1350, 1e-05
    %v1355 = vrsqrt.pop %v1353
    %v1356 = vrsqrt.pop %v1354
    %v1357 = vmul.f32 %v1351, %v1355
    %v1358 = vmul.f32 %v1352, %v1356
    %v1359 = vlaneseq
    %v1360 = vshrl.u32 %v1359, 7
    %v1361 = vsub.s32 0, %v1360
    %v1362 = vrot.slane %v70, %v1361
    %v1363 = vmul.f32 %v1357, %v1362
    %v1364 = vmul.f32 %v1358, %v1362
    %v1365 = vlaneseq
    %v1366 = vshrl.u32 %v1365, 7
    %v1367 = vsub.s32 0, %v1366
    %v1368 = vrot.slane %v71, %v1367
    %v1369 = vadd.f32 %v1363, %v1368
    %v1370 = vadd.f32 %v1364, %v1368
    %1371 = vst.msk [vmem:[#allocation2] sm:$0xff] %vm1097, %v1369
    %1372 = vst.msk [vmem:[#allocation2 + $0x8] sm:$0xff] %vm1097, %v1370
    // Predicated region
    $region30: #{tpu_custom_call.1} parent=1 // pred_check
      _
    $region31: #{tpu_custom_call.1} parent=1 // pred_check_branch
      %1374 = sbr.rel (0) target = $region33
    $region32: #{tpu_custom_call.1} parent=1 // pred_region
      %s1376 = ssub.s32 256, 256
      %1377 = vsyncadd [#allocation3], %s1376
      %s1378 = sshll.u32 [#allocation2], 4
      %s1379 = int_to_ptr.vmem [resolvable:$true] %s1378
      %1384 = dma.vmem_to_hbm [thread:$0]  %s1379, 256, %s7, [#allocation3], 128, 128, 8
    $region33: #{tpu_custom_call.1} parent=1 // pred_fallthru
      _
    // Predicated region
    $region34: #{tpu_custom_call.1} parent=1 // pred_check
      _
    $region35: #{tpu_custom_call.1} parent=1 // pred_check_branch
      %1386 = sbr.rel (0) target = $region37
    $region36: #{tpu_custom_call.1} parent=1 // pred_region
      %1387 = dma.done [#allocation3], 256
    $region37: #{tpu_custom_call.1} parent=1 // pred_fallthru
      _
    %1388 = vsyncpa [#allocation3], 1

</llo_original>
